<compile_context>
chip_gen: v5e
topology: v5e:2x2
jax: 0.10.0
libtpu: 0.0.40
codegen_flags: <defaults>
</compile_context>

<pallas_src>
import numpy as np
import jax
import jax.numpy as jnp
from jax.experimental import pallas as pl
from jax.experimental.pallas import tpu as pltpu

# -------------------- configuration (small, consistent with the module) --------------------
X_DIM = 8            # vertex input feature dim
HIDDEN = 32          # hidden
EMBED = HIDDEN       # embed_dim defaults to hidden
OUT_SIZE = 3         # out_size
NUM_LAYERS = 2       # num_layers
MAX_DIM = 2          # max_dim
FINAL_MULT = 2       # final_hidden_multiplier
FH = FINAL_MULT * HIDDEN          # 64
NUM_GRAPHS = 2
N_CELLS = (16, 32, 16)            # (#vertices, #edges, #2-cells) -- 16-row aligned
NT = sum(N_CELLS)                 # 64 stacked cells
ROWS = ((0, N_CELLS[0]),
        (N_CELLS[0], N_CELLS[0] + N_CELLS[1]),
        (N_CELLS[0] + N_CELLS[1], NT))
BN_EPS = 1e-5
BN_SCALE = 1.0 / np.sqrt(1.0 + BN_EPS)   # eval-mode BN w/ fresh stats folds to this scale

MXU_DTYPE = jnp.bfloat16   # matmul operand dtype (f32 accumulation on the MXU)


# -------------------- the single fused Pallas kernel --------------------

def _fused_forward_kernel(
        v_x_ref,                                                    # (N0, X_DIM) f32
        a_up_ref, a_dn_ref, b_all_ref,                              # (NT, NT) stacked ops, bf16
        p0_ref, p1_ref, p2_ref,                                     # (G, n_d) per-graph pooling, bf16
        ve_w_ref, ve_b_ref,                                         # v_embed Linear
        bdw1_ref, bdb1_ref, bdw2_ref, bdb2_ref, wc_ref, bc_ref,     # packed conv params (BN folded)
        l1w_ref, l1b_ref, l2w_ref, l2b_ref,                         # readout Linears (packed)
        o_ref):                                                     # (G, OUT_SIZE) f32

    def mx(a, b):
        # bf16 operands on the MXU, f32 accumulate; element-wise math stays f32.
        return jnp.dot(a, b, preferred_element_type=jnp.float32)

    bf = lambda a: a.astype(MXU_DTYPE)

    a_up = a_up_ref[...]
    a_dn = a_dn_ref[...]
    b_all = b_all_ref[...]

    # ---- init_conv (OGBEmbedVEWithReduce, embed_edge=False, init_reduce='sum') ----
    vx = mx(bf(v_x_ref[...]), ve_w_ref[...]) + ve_b_ref[...]            # vertex embed, (N0,H) f32
    x0 = jnp.concatenate(
        [vx, jnp.zeros((NT - N_CELLS[0], HIDDEN), jnp.float32)], axis=0)  # [vx; 0; 0]
    x1 = mx(b_all, bf(x0)) + x0                                          # [vx; ex; 0]
    x = mx(b_all, bf(x1)) + x0                                           # [vx; ex; cx]
    # in_dropout: identity (eval mode)

    # ---- CINpp conv layers (fully unrolled at trace time) ----
    for l in range(NUM_LAYERS):
        xb = bf(x)                                  # single bf16 copy reused by 3 matmuls
        # aggregation + (1+eps)*x skip (eps=0); zero operator blocks reduce to plain x.
        agg_up = mx(a_up, xb) + x
        agg_dn = mx(a_dn, xb) + x
        agg_bd = mx(b_all, xb) + x
        # branch concat order matches torch.cat([up, down, boundaries], dim=-1)
        agg_cat = bf(jnp.concatenate([agg_up, agg_dn, agg_bd], axis=-1))   # (NT, 3H) bf16

        ys = []
        for d in range(MAX_DIM + 1):
            r0, r1 = ROWS[d]
            idx = l * (MAX_DIM + 1) + d
            a_d = agg_cat[r0:r1, :]                                        # (n_d, 3H), tile aligned
            # update nets (block-diag packed): Linear-BN-ReLU-Linear-BN-ReLU (BN folded)
            h = jnp.maximum(mx(a_d, bdw1_ref[idx]) + bdb1_ref[idx], 0.0)
            h = jnp.maximum(mx(bf(h), bdw2_ref[idx]) + bdb2_ref[idx], 0.0)
            # combine_nn: single concat @ WC (96,32) matmul, folded bias/BN, ReLU
            y = jnp.maximum(mx(bf(h), wc_ref[idx]) + bc_ref[idx], 0.0)
            ys.append(y)
        x = jnp.concatenate(ys, axis=0)             # new stacked features; dropout: identity

    # ---- pool_complex (readout='sum') + lin1 + ReLU + final_readout='sum' + lin2 ----
    xb = bf(x)
    pooled = jnp.concatenate(
        [mx(p0_ref[...], xb[ROWS[0][0]:ROWS[0][1], :]),
         mx(p1_ref[...], xb[ROWS[1][0]:ROWS[1][1], :]),
         mx(p2_ref[...], xb[ROWS[2][0]:ROWS[2][1], :])], axis=-1)          # (G, 3H) f32
    act = jnp.maximum(mx(bf(pooled), l1w_ref[...]) + l1b_ref[...], 0.0)    # block-diag lin1, (G, 3*FH)
    # final_readout sum folded into lin2 via row-replicated L2W; ph_x=None -> lin_ph skipped.
    o_ref[...] = mx(bf(act), l2w_ref[...]) + l2b_ref[...]                  # (G, OUT_SIZE)


def fused_forward(v_x, ops, pools, params):
    inputs = (
        v_x,
        ops['a_up'], ops['a_dn'], ops['b_all'],
        pools[0], pools[1], pools[2],
        params['ve_w'], params['ve_b'],
        params['BDW1'], params['BDB1'], params['BDW2'], params['BDB2'],
        params['WC'], params['BC'],
        params['L1W'], params['L1B'], params['L2W'], params['L2B'],
    )
    return pl.pallas_call(
        _fused_forward_kernel,
        out_shape=jax.ShapeDtypeStruct((NUM_GRAPHS, OUT_SIZE), jnp.float32),
        in_specs=[pl.BlockSpec(memory_space=pltpu.MemorySpace.VMEM)] * len(inputs),
        out_specs=pl.BlockSpec(memory_space=pltpu.MemorySpace.VMEM),
    )(*inputs)


# -------------------- deterministic parameter init (BN folded, block-diag packed) --------------------

def init_linear(key, din, dout):
    k1, k2 = jax.random.split(key)
    lim = 1.0 / np.sqrt(din)
    w = jax.random.uniform(k1, (din, dout), jnp.float32, -lim, lim)
    b = jax.random.uniform(k2, (1, dout), jnp.float32, -lim, lim)
    return np.asarray(w), np.asarray(b)


def init_model_params(key):
    f32 = jnp.float32
    keys = jax.random.split(key, 4)

    # v_embed (no BN / activation afterwards)
    ve_w, ve_b = init_linear(keys[0], X_DIM, EMBED)

    # conv layers: per (layer, dim) three update nets (packed block-diagonally) + combine_nn.
    # Eval BN (mean=0, var=1, gamma=1, beta=0) folds to a scale on the preceding Linear.
    H3 = 3 * HIDDEN
    BDW1, BDB1, BDW2, BDB2, WC, BC = [], [], [], [], [], []
    conv_keys = jax.random.split(keys[1], NUM_LAYERS * (MAX_DIM + 1))
    for l in range(NUM_LAYERS):
        for d in range(MAX_DIM + 1):
            ks = jax.random.split(conv_keys[l * (MAX_DIM + 1) + d], 7)
            bdw1 = np.zeros((H3, H3), np.float32)
            bdw2 = np.zeros((H3, H3), np.float32)
            bdb1 = np.zeros((1, H3), np.float32)
            bdb2 = np.zeros((1, H3), np.float32)
            for i in range(3):   # branch order 0=up, 1=down, 2=boundaries
                w1, b1 = init_linear(ks[2 * i], HIDDEN, HIDDEN)       # layer_dim == hidden here
                w2, b2 = init_linear(ks[2 * i + 1], HIDDEN, HIDDEN)
                s = slice(i * HIDDEN, (i + 1) * HIDDEN)
                bdw1[s, s] = w1 * BN_SCALE
                bdw2[s, s] = w2 * BN_SCALE
                bdb1[:, s] = b1 * BN_SCALE
                bdb2[:, s] = b2 * BN_SCALE
            wc, bc = init_linear(ks[6], H3, HIDDEN)   # combine weight kept in concat-row order
            BDW1.append(bdw1); BDB1.append(bdb1)
            BDW2.append(bdw2); BDB2.append(bdb2)
            WC.append(wc * BN_SCALE); BC.append(bc * BN_SCALE)

    # readout: block-diagonal lin1 over the concat of per-dim pooled features
    l1keys = jax.random.split(keys[2], MAX_DIM + 1)
    l1w_blk = np.zeros((H3, 3 * FH), np.float32)
    l1b_cat = np.zeros((1, 3 * FH), np.float32)
    for d in range(MAX_DIM + 1):
        w, b = init_linear(l1keys[d], HIDDEN, FH)
        l1w_blk[d * HIDDEN:(d + 1) * HIDDEN, d * FH:(d + 1) * FH] = w
        l1b_cat[:, d * FH:(d + 1) * FH] = b
    # lin2; final_readout='sum' folded in by replicating its rows per readout dim
    l2w, l2b = init_linear(keys[3], FH, OUT_SIZE)
    l2w_rep = np.concatenate([l2w] * (MAX_DIM + 1), axis=0)   # (3*FH, OUT_SIZE)
    # NOTE: lin_ph is unused in this forward (ph_x=None), so it is not built.

    return dict(
        ve_w=jnp.asarray(ve_w, MXU_DTYPE), ve_b=jnp.asarray(ve_b, f32),
        BDW1=jnp.asarray(np.stack(BDW1), MXU_DTYPE), BDB1=jnp.asarray(np.stack(BDB1), f32),
        BDW2=jnp.asarray(np.stack(BDW2), MXU_DTYPE), BDB2=jnp.asarray(np.stack(BDB2), f32),
        WC=jnp.asarray(np.stack(WC), MXU_DTYPE), BC=jnp.asarray(np.stack(BC), f32),
        L1W=jnp.asarray(l1w_blk, MXU_DTYPE), L1B=jnp.asarray(l1b_cat, f32),
        L2W=jnp.asarray(l2w_rep, MXU_DTYPE), L2B=jnp.asarray(l2b, f32),
    )


# -------------------- synthetic cell complex (stacked dense operators) --------------------

def build_complex():
    n0, n1, n2 = N_CELLS
    # boundary incidence of edges over vertices (each edge has 2 distinct vertices)
    b1 = np.zeros((n1, n0), np.float32)
    for e in range(n1):
        v1 = e % n0
        v2 = (e + 1 + (e // n0)) % n0
        b1[e, v1] = 1.0
        b1[e, v2] = 1.0
    # boundary incidence of 2-cells over edges (each 2-cell has 3 boundary edges)
    b2 = np.zeros((n2, n1), np.float32)
    for c in range(n2):
        for k in range(3):
            b2[c, (3 * c + k) % n1] = 1.0

    def offdiag(a):
        a = (a > 0).astype(np.float32)
        np.fill_diagonal(a, 0.0)
        return a

    r1, r2 = ROWS[1][0], ROWS[2][0]
    # stacked upper adjacency (zero block for dim 2 -> that branch reduces to the skip)
    a_up = np.zeros((NT, NT), np.float32)
    a_up[:r1, :r1] = offdiag(b1.T @ b1)         # vertices via shared edges
    a_up[r1:r2, r1:r2] = offdiag(b2.T @ b2)     # edges via shared 2-cells
    # stacked lower adjacency (zero block for dim 0)
    a_dn = np.zeros((NT, NT), np.float32)
    a_dn[r1:r2, r1:r2] = offdiag(b1 @ b1.T)     # edges via shared vertices
    a_dn[r2:, r2:] = offdiag(b2 @ b2.T)         # 2-cells via shared edges
    # stacked boundary operator (receivers on rows, lower-dim senders on columns)
    b_all = np.zeros((NT, NT), np.float32)
    b_all[r1:r2, :r1] = b1
    b_all[r2:, r1:r2] = b2

    ops = dict(a_up=jnp.asarray(a_up, MXU_DTYPE),
               a_dn=jnp.asarray(a_dn, MXU_DTYPE),
               b_all=jnp.asarray(b_all, MXU_DTYPE))

    # per-graph sum-pooling matrices (first half of cells -> graph 0); 0/1 exact in bf16
    pools = []
    for n in N_CELLS:
        p = np.zeros((NUM_GRAPHS, n), np.float32)
        p[0, :n // 2] = 1.0
        p[1, n // 2:] = 1.0
        pools.append(jnp.asarray(p, MXU_DTYPE))
    return ops, pools


# -------------------- main --------------------

if __name__ == "__main__":
    key = jax.random.PRNGKey(0)
    k_data, k_params = jax.random.split(key)

    ops, pools = build_complex()
    v_x = jax.random.normal(k_data, (N_CELLS[0], X_DIM), jnp.float32)
    params = init_model_params(k_params)

    out = fused_forward(v_x, ops, pools, params)
    out = jax.block_until_ready(out)
    assert out.shape == (NUM_GRAPHS, OUT_SIZE)
    assert bool(jnp.all(jnp.isfinite(out)))
    print("KERNEL_OK")
</pallas_src>

<mosaic_0001>
module attributes {stable_mosaic.version = 11 : i64} {
  func.func @_fused_forward_kernel(%arg0: memref<16x8xf32, #tpu.memory_space<vmem>>, %arg1: memref<64x64xbf16, #tpu.memory_space<vmem>>, %arg2: memref<64x64xbf16, #tpu.memory_space<vmem>>, %arg3: memref<64x64xbf16, #tpu.memory_space<vmem>>, %arg4: memref<2x16xbf16, #tpu.memory_space<vmem>>, %arg5: memref<2x32xbf16, #tpu.memory_space<vmem>>, %arg6: memref<2x16xbf16, #tpu.memory_space<vmem>>, %arg7: memref<8x32xbf16, #tpu.memory_space<vmem>>, %arg8: memref<1x32xf32, #tpu.memory_space<vmem>>, %arg9: memref<6x96x96xbf16, #tpu.memory_space<vmem>>, %arg10: memref<6x1x96xf32, #tpu.memory_space<vmem>>, %arg11: memref<6x96x96xbf16, #tpu.memory_space<vmem>>, %arg12: memref<6x1x96xf32, #tpu.memory_space<vmem>>, %arg13: memref<6x96x32xbf16, #tpu.memory_space<vmem>>, %arg14: memref<6x1x32xf32, #tpu.memory_space<vmem>>, %arg15: memref<96x192xbf16, #tpu.memory_space<vmem>>, %arg16: memref<1x192xf32, #tpu.memory_space<vmem>>, %arg17: memref<192x3xbf16, #tpu.memory_space<vmem>>, %arg18: memref<1x3xf32, #tpu.memory_space<vmem>>, %arg19: memref<2x3xf32, #tpu.memory_space<vmem>>) attributes {dimension_semantics = [], scalar_prefetch = 0 : i64, scratch_operands = 0 : i64, tpu.core_type = #tpu.core_type<tc>} {
    %c0 = arith.constant 0 : index
    %c0_0 = arith.constant 0 : index
    %0 = vector.load %arg1[%c0, %c0_0] : memref<64x64xbf16, #tpu.memory_space<vmem>>, vector<64x64xbf16>
    %c0_1 = arith.constant 0 : index
    %c0_2 = arith.constant 0 : index
    %1 = vector.load %arg2[%c0_1, %c0_2] : memref<64x64xbf16, #tpu.memory_space<vmem>>, vector<64x64xbf16>
    %c0_3 = arith.constant 0 : index
    %c0_4 = arith.constant 0 : index
    %2 = vector.load %arg3[%c0_3, %c0_4] : memref<64x64xbf16, #tpu.memory_space<vmem>>, vector<64x64xbf16>
    %c0_5 = arith.constant 0 : index
    %c0_6 = arith.constant 0 : index
    %3 = vector.load %arg0[%c0_5, %c0_6] : memref<16x8xf32, #tpu.memory_space<vmem>>, vector<16x8xf32>
    %4 = arith.truncf %3 : vector<16x8xf32> to vector<16x8xbf16>
    %c0_7 = arith.constant 0 : index
    %c0_8 = arith.constant 0 : index
    %5 = vector.load %arg7[%c0_7, %c0_8] : memref<8x32xbf16, #tpu.memory_space<vmem>>, vector<8x32xbf16>
    %cst = arith.constant dense<0.000000e+00> : vector<16x32xf32>
    %6 = tpu.matmul %4, %5, %cst {dimension_numbers = #tpu.dot_dimension_numbers<[1], [0], [0], [1], [0, 0, 1, 1], [], []>} : vector<16x8xbf16>, vector<8x32xbf16>, vector<16x32xf32> -> vector<16x32xf32>
    %c0_9 = arith.constant 0 : index
    %c0_10 = arith.constant 0 : index
    %7 = vector.load %arg8[%c0_9, %c0_10] : memref<1x32xf32, #tpu.memory_space<vmem>>, vector<1x32xf32>
    %8 = vector.broadcast %7 : vector<1x32xf32> to vector<16x32xf32>
    %9 = arith.addf %6, %8 : vector<16x32xf32>
    %cst_11 = arith.constant 0.000000e+00 : f32
    %10 = vector.broadcast %cst_11 : f32 to vector<48x32xf32>
    %11 = tpu.concatenate %9, %10 in 0 : vector<16x32xf32>, vector<48x32xf32> -> vector<64x32xf32>
    %12 = arith.truncf %11 : vector<64x32xf32> to vector<64x32xbf16>
    %cst_12 = arith.constant dense<0.000000e+00> : vector<64x32xf32>
    %13 = tpu.matmul %2, %12, %cst_12 {dimension_numbers = #tpu.dot_dimension_numbers<[1], [0], [0], [1], [0, 0, 1, 1], [], []>} : vector<64x64xbf16>, vector<64x32xbf16>, vector<64x32xf32> -> vector<64x32xf32>
    %14 = arith.addf %13, %11 : vector<64x32xf32>
    %15 = arith.truncf %14 : vector<64x32xf32> to vector<64x32xbf16>
    %cst_13 = arith.constant dense<0.000000e+00> : vector<64x32xf32>
    %16 = tpu.matmul %2, %15, %cst_13 {dimension_numbers = #tpu.dot_dimension_numbers<[1], [0], [0], [1], [0, 0, 1, 1], [], []>} : vector<64x64xbf16>, vector<64x32xbf16>, vector<64x32xf32> -> vector<64x32xf32>
    %17 = arith.addf %16, %11 : vector<64x32xf32>
    %18 = arith.truncf %17 : vector<64x32xf32> to vector<64x32xbf16>
    %cst_14 = arith.constant dense<0.000000e+00> : vector<64x32xf32>
    %19 = tpu.matmul %0, %18, %cst_14 {dimension_numbers = #tpu.dot_dimension_numbers<[1], [0], [0], [1], [0, 0, 1, 1], [], []>} : vector<64x64xbf16>, vector<64x32xbf16>, vector<64x32xf32> -> vector<64x32xf32>
    %20 = arith.addf %19, %17 : vector<64x32xf32>
    %cst_15 = arith.constant dense<0.000000e+00> : vector<64x32xf32>
    %21 = tpu.matmul %1, %18, %cst_15 {dimension_numbers = #tpu.dot_dimension_numbers<[1], [0], [0], [1], [0, 0, 1, 1], [], []>} : vector<64x64xbf16>, vector<64x32xbf16>, vector<64x32xf32> -> vector<64x32xf32>
    %22 = arith.addf %21, %17 : vector<64x32xf32>
    %cst_16 = arith.constant dense<0.000000e+00> : vector<64x32xf32>
    %23 = tpu.matmul %2, %18, %cst_16 {dimension_numbers = #tpu.dot_dimension_numbers<[1], [0], [0], [1], [0, 0, 1, 1], [], []>} : vector<64x64xbf16>, vector<64x32xbf16>, vector<64x32xf32> -> vector<64x32xf32>
    %24 = arith.addf %23, %17 : vector<64x32xf32>
    %25 = tpu.concatenate %20, %22, %24 in 1 : vector<64x32xf32>, vector<64x32xf32>, vector<64x32xf32> -> vector<64x96xf32>
    %26 = arith.truncf %25 : vector<64x96xf32> to vector<64x96xbf16>
    %27 = vector.extract_strided_slice %26 {offsets = [0, 0], sizes = [16, 96], strides = [1, 1]} : vector<64x96xbf16> to vector<16x96xbf16>
    %c0_17 = arith.constant 0 : index
    %c0_18 = arith.constant 0 : index
    %c0_19 = arith.constant 0 : index
    %28 = vector.load %arg9[%c0_17, %c0_18, %c0_19] : memref<6x96x96xbf16, #tpu.memory_space<vmem>>, vector<1x96x96xbf16>
    %29 = vector.shape_cast %28 : vector<1x96x96xbf16> to vector<96x96xbf16>
    %cst_20 = arith.constant dense<0.000000e+00> : vector<16x96xf32>
    %30 = tpu.matmul %27, %29, %cst_20 {dimension_numbers = #tpu.dot_dimension_numbers<[1], [0], [0], [1], [0, 0, 1, 1], [], []>} : vector<16x96xbf16>, vector<96x96xbf16>, vector<16x96xf32> -> vector<16x96xf32>
    %c0_21 = arith.constant 0 : index
    %c0_22 = arith.constant 0 : index
    %c0_23 = arith.constant 0 : index
    %31 = vector.load %arg10[%c0_21, %c0_22, %c0_23] : memref<6x1x96xf32, #tpu.memory_space<vmem>>, vector<1x1x96xf32>
    %32 = vector.shape_cast %31 : vector<1x1x96xf32> to vector<1x96xf32>
    %33 = vector.broadcast %32 : vector<1x96xf32> to vector<16x96xf32>
    %34 = arith.addf %30, %33 : vector<16x96xf32>
    %cst_24 = arith.constant 0.000000e+00 : f32
    %35 = vector.broadcast %cst_24 : f32 to vector<16x96xf32>
    %36 = arith.maximumf %34, %35 : vector<16x96xf32>
    %37 = arith.truncf %36 : vector<16x96xf32> to vector<16x96xbf16>
    %c0_25 = arith.constant 0 : index
    %c0_26 = arith.constant 0 : index
    %c0_27 = arith.constant 0 : index
    %38 = vector.load %arg11[%c0_25, %c0_26, %c0_27] : memref<6x96x96xbf16, #tpu.memory_space<vmem>>, vector<1x96x96xbf16>
    %39 = vector.shape_cast %38 : vector<1x96x96xbf16> to vector<96x96xbf16>
    %cst_28 = arith.constant dense<0.000000e+00> : vector<16x96xf32>
    %40 = tpu.matmul %37, %39, %cst_28 {dimension_numbers = #tpu.dot_dimension_numbers<[1], [0], [0], [1], [0, 0, 1, 1], [], []>} : vector<16x96xbf16>, vector<96x96xbf16>, vector<16x96xf32> -> vector<16x96xf32>
    %c0_29 = arith.constant 0 : index
    %c0_30 = arith.constant 0 : index
    %c0_31 = arith.constant 0 : index
    %41 = vector.load %arg12[%c0_29, %c0_30, %c0_31] : memref<6x1x96xf32, #tpu.memory_space<vmem>>, vector<1x1x96xf32>
    %42 = vector.shape_cast %41 : vector<1x1x96xf32> to vector<1x96xf32>
    %43 = vector.broadcast %42 : vector<1x96xf32> to vector<16x96xf32>
    %44 = arith.addf %40, %43 : vector<16x96xf32>
    %cst_32 = arith.constant 0.000000e+00 : f32
    %45 = vector.broadcast %cst_32 : f32 to vector<16x96xf32>
    %46 = arith.maximumf %44, %45 : vector<16x96xf32>
    %47 = arith.truncf %46 : vector<16x96xf32> to vector<16x96xbf16>
    %c0_33 = arith.constant 0 : index
    %c0_34 = arith.constant 0 : index
    %c0_35 = arith.constant 0 : index
    %48 = vector.load %arg13[%c0_33, %c0_34, %c0_35] : memref<6x96x32xbf16, #tpu.memory_space<vmem>>, vector<1x96x32xbf16>
    %49 = vector.shape_cast %48 : vector<1x96x32xbf16> to vector<96x32xbf16>
    %cst_36 = arith.constant dense<0.000000e+00> : vector<16x32xf32>
    %50 = tpu.matmul %47, %49, %cst_36 {dimension_numbers = #tpu.dot_dimension_numbers<[1], [0], [0], [1], [0, 0, 1, 1], [], []>} : vector<16x96xbf16>, vector<96x32xbf16>, vector<16x32xf32> -> vector<16x32xf32>
    %c0_37 = arith.constant 0 : index
    %c0_38 = arith.constant 0 : index
    %c0_39 = arith.constant 0 : index
    %51 = vector.load %arg14[%c0_37, %c0_38, %c0_39] : memref<6x1x32xf32, #tpu.memory_space<vmem>>, vector<1x1x32xf32>
    %52 = vector.shape_cast %51 : vector<1x1x32xf32> to vector<1x32xf32>
    %53 = vector.broadcast %52 : vector<1x32xf32> to vector<16x32xf32>
    %54 = arith.addf %50, %53 : vector<16x32xf32>
    %cst_40 = arith.constant 0.000000e+00 : f32
    %55 = vector.broadcast %cst_40 : f32 to vector<16x32xf32>
    %56 = arith.maximumf %54, %55 : vector<16x32xf32>
    %57 = vector.extract_strided_slice %26 {offsets = [16, 0], sizes = [32, 96], strides = [1, 1]} : vector<64x96xbf16> to vector<32x96xbf16>
    %c1 = arith.constant 1 : index
    %c0_41 = arith.constant 0 : index
    %c0_42 = arith.constant 0 : index
    %58 = vector.load %arg9[%c1, %c0_41, %c0_42] : memref<6x96x96xbf16, #tpu.memory_space<vmem>>, vector<1x96x96xbf16>
    %59 = vector.shape_cast %58 : vector<1x96x96xbf16> to vector<96x96xbf16>
    %cst_43 = arith.constant dense<0.000000e+00> : vector<32x96xf32>
    %60 = tpu.matmul %57, %59, %cst_43 {dimension_numbers = #tpu.dot_dimension_numbers<[1], [0], [0], [1], [0, 0, 1, 1], [], []>} : vector<32x96xbf16>, vector<96x96xbf16>, vector<32x96xf32> -> vector<32x96xf32>
    %c1_44 = arith.constant 1 : index
    %c0_45 = arith.constant 0 : index
    %c0_46 = arith.constant 0 : index
    %61 = vector.load %arg10[%c1_44, %c0_45, %c0_46] : memref<6x1x96xf32, #tpu.memory_space<vmem>>, vector<1x1x96xf32>
    %62 = vector.shape_cast %61 : vector<1x1x96xf32> to vector<1x96xf32>
    %63 = vector.broadcast %62 : vector<1x96xf32> to vector<32x96xf32>
    %64 = arith.addf %60, %63 : vector<32x96xf32>
    %cst_47 = arith.constant 0.000000e+00 : f32
    %65 = vector.broadcast %cst_47 : f32 to vector<32x96xf32>
    %66 = arith.maximumf %64, %65 : vector<32x96xf32>
    %67 = arith.truncf %66 : vector<32x96xf32> to vector<32x96xbf16>
    %c1_48 = arith.constant 1 : index
    %c0_49 = arith.constant 0 : index
    %c0_50 = arith.constant 0 : index
    %68 = vector.load %arg11[%c1_48, %c0_49, %c0_50] : memref<6x96x96xbf16, #tpu.memory_space<vmem>>, vector<1x96x96xbf16>
    %69 = vector.shape_cast %68 : vector<1x96x96xbf16> to vector<96x96xbf16>
    %cst_51 = arith.constant dense<0.000000e+00> : vector<32x96xf32>
    %70 = tpu.matmul %67, %69, %cst_51 {dimension_numbers = #tpu.dot_dimension_numbers<[1], [0], [0], [1], [0, 0, 1, 1], [], []>} : vector<32x96xbf16>, vector<96x96xbf16>, vector<32x96xf32> -> vector<32x96xf32>
    %c1_52 = arith.constant 1 : index
    %c0_53 = arith.constant 0 : index
    %c0_54 = arith.constant 0 : index
    %71 = vector.load %arg12[%c1_52, %c0_53, %c0_54] : memref<6x1x96xf32, #tpu.memory_space<vmem>>, vector<1x1x96xf32>
    %72 = vector.shape_cast %71 : vector<1x1x96xf32> to vector<1x96xf32>
    %73 = vector.broadcast %72 : vector<1x96xf32> to vector<32x96xf32>
    %74 = arith.addf %70, %73 : vector<32x96xf32>
    %cst_55 = arith.constant 0.000000e+00 : f32
    %75 = vector.broadcast %cst_55 : f32 to vector<32x96xf32>
    %76 = arith.maximumf %74, %75 : vector<32x96xf32>
    %77 = arith.truncf %76 : vector<32x96xf32> to vector<32x96xbf16>
    %c1_56 = arith.constant 1 : index
    %c0_57 = arith.constant 0 : index
    %c0_58 = arith.constant 0 : index
    %78 = vector.load %arg13[%c1_56, %c0_57, %c0_58] : memref<6x96x32xbf16, #tpu.memory_space<vmem>>, vector<1x96x32xbf16>
    %79 = vector.shape_cast %78 : vector<1x96x32xbf16> to vector<96x32xbf16>
    %cst_59 = arith.constant dense<0.000000e+00> : vector<32x32xf32>
    %80 = tpu.matmul %77, %79, %cst_59 {dimension_numbers = #tpu.dot_dimension_numbers<[1], [0], [0], [1], [0, 0, 1, 1], [], []>} : vector<32x96xbf16>, vector<96x32xbf16>, vector<32x32xf32> -> vector<32x32xf32>
    %c1_60 = arith.constant 1 : index
    %c0_61 = arith.constant 0 : index
    %c0_62 = arith.constant 0 : index
    %81 = vector.load %arg14[%c1_60, %c0_61, %c0_62] : memref<6x1x32xf32, #tpu.memory_space<vmem>>, vector<1x1x32xf32>
    %82 = vector.shape_cast %81 : vector<1x1x32xf32> to vector<1x32xf32>
    %83 = vector.broadcast %82 : vector<1x32xf32> to vector<32x32xf32>
    %84 = arith.addf %80, %83 : vector<32x32xf32>
    %cst_63 = arith.constant 0.000000e+00 : f32
    %85 = vector.broadcast %cst_63 : f32 to vector<32x32xf32>
    %86 = arith.maximumf %84, %85 : vector<32x32xf32>
    %87 = vector.extract_strided_slice %26 {offsets = [48, 0], sizes = [16, 96], strides = [1, 1]} : vector<64x96xbf16> to vector<16x96xbf16>
    %c2 = arith.constant 2 : index
    %c0_64 = arith.constant 0 : index
    %c0_65 = arith.constant 0 : index
    %88 = vector.load %arg9[%c2, %c0_64, %c0_65] : memref<6x96x96xbf16, #tpu.memory_space<vmem>>, vector<1x96x96xbf16>
    %89 = vector.shape_cast %88 : vector<1x96x96xbf16> to vector<96x96xbf16>
    %cst_66 = arith.constant dense<0.000000e+00> : vector<16x96xf32>
    %90 = tpu.matmul %87, %89, %cst_66 {dimension_numbers = #tpu.dot_dimension_numbers<[1], [0], [0], [1], [0, 0, 1, 1], [], []>} : vector<16x96xbf16>, vector<96x96xbf16>, vector<16x96xf32> -> vector<16x96xf32>
    %c2_67 = arith.constant 2 : index
    %c0_68 = arith.constant 0 : index
    %c0_69 = arith.constant 0 : index
    %91 = vector.load %arg10[%c2_67, %c0_68, %c0_69] : memref<6x1x96xf32, #tpu.memory_space<vmem>>, vector<1x1x96xf32>
    %92 = vector.shape_cast %91 : vector<1x1x96xf32> to vector<1x96xf32>
    %93 = vector.broadcast %92 : vector<1x96xf32> to vector<16x96xf32>
    %94 = arith.addf %90, %93 : vector<16x96xf32>
    %cst_70 = arith.constant 0.000000e+00 : f32
    %95 = vector.broadcast %cst_70 : f32 to vector<16x96xf32>
    %96 = arith.maximumf %94, %95 : vector<16x96xf32>
    %97 = arith.truncf %96 : vector<16x96xf32> to vector<16x96xbf16>
    %c2_71 = arith.constant 2 : index
    %c0_72 = arith.constant 0 : index
    %c0_73 = arith.constant 0 : index
    %98 = vector.load %arg11[%c2_71, %c0_72, %c0_73] : memref<6x96x96xbf16, #tpu.memory_space<vmem>>, vector<1x96x96xbf16>
    %99 = vector.shape_cast %98 : vector<1x96x96xbf16> to vector<96x96xbf16>
    %cst_74 = arith.constant dense<0.000000e+00> : vector<16x96xf32>
    %100 = tpu.matmul %97, %99, %cst_74 {dimension_numbers = #tpu.dot_dimension_numbers<[1], [0], [0], [1], [0, 0, 1, 1], [], []>} : vector<16x96xbf16>, vector<96x96xbf16>, vector<16x96xf32> -> vector<16x96xf32>
    %c2_75 = arith.constant 2 : index
    %c0_76 = arith.constant 0 : index
    %c0_77 = arith.constant 0 : index
    %101 = vector.load %arg12[%c2_75, %c0_76, %c0_77] : memref<6x1x96xf32, #tpu.memory_space<vmem>>, vector<1x1x96xf32>
    %102 = vector.shape_cast %101 : vector<1x1x96xf32> to vector<1x96xf32>
    %103 = vector.broadcast %102 : vector<1x96xf32> to vector<16x96xf32>
    %104 = arith.addf %100, %103 : vector<16x96xf32>
    %cst_78 = arith.constant 0.000000e+00 : f32
    %105 = vector.broadcast %cst_78 : f32 to vector<16x96xf32>
    %106 = arith.maximumf %104, %105 : vector<16x96xf32>
    %107 = arith.truncf %106 : vector<16x96xf32> to vector<16x96xbf16>
    %c2_79 = arith.constant 2 : index
    %c0_80 = arith.constant 0 : index
    %c0_81 = arith.constant 0 : index
    %108 = vector.load %arg13[%c2_79, %c0_80, %c0_81] : memref<6x96x32xbf16, #tpu.memory_space<vmem>>, vector<1x96x32xbf16>
    %109 = vector.shape_cast %108 : vector<1x96x32xbf16> to vector<96x32xbf16>
    %cst_82 = arith.constant dense<0.000000e+00> : vector<16x32xf32>
    %110 = tpu.matmul %107, %109, %cst_82 {dimension_numbers = #tpu.dot_dimension_numbers<[1], [0], [0], [1], [0, 0, 1, 1], [], []>} : vector<16x96xbf16>, vector<96x32xbf16>, vector<16x32xf32> -> vector<16x32xf32>
    %c2_83 = arith.constant 2 : index
    %c0_84 = arith.constant 0 : index
    %c0_85 = arith.constant 0 : index
    %111 = vector.load %arg14[%c2_83, %c0_84, %c0_85] : memref<6x1x32xf32, #tpu.memory_space<vmem>>, vector<1x1x32xf32>
    %112 = vector.shape_cast %111 : vector<1x1x32xf32> to vector<1x32xf32>
    %113 = vector.broadcast %112 : vector<1x32xf32> to vector<16x32xf32>
    %114 = arith.addf %110, %113 : vector<16x32xf32>
    %cst_86 = arith.constant 0.000000e+00 : f32
    %115 = vector.broadcast %cst_86 : f32 to vector<16x32xf32>
    %116 = arith.maximumf %114, %115 : vector<16x32xf32>
    %117 = tpu.concatenate %56, %86, %116 in 0 : vector<16x32xf32>, vector<32x32xf32>, vector<16x32xf32> -> vector<64x32xf32>
    %118 = arith.truncf %117 : vector<64x32xf32> to vector<64x32xbf16>
    %cst_87 = arith.constant dense<0.000000e+00> : vector<64x32xf32>
    %119 = tpu.matmul %0, %118, %cst_87 {dimension_numbers = #tpu.dot_dimension_numbers<[1], [0], [0], [1], [0, 0, 1, 1], [], []>} : vector<64x64xbf16>, vector<64x32xbf16>, vector<64x32xf32> -> vector<64x32xf32>
    %120 = arith.addf %119, %117 : vector<64x32xf32>
    %cst_88 = arith.constant dense<0.000000e+00> : vector<64x32xf32>
    %121 = tpu.matmul %1, %118, %cst_88 {dimension_numbers = #tpu.dot_dimension_numbers<[1], [0], [0], [1], [0, 0, 1, 1], [], []>} : vector<64x64xbf16>, vector<64x32xbf16>, vector<64x32xf32> -> vector<64x32xf32>
    %122 = arith.addf %121, %117 : vector<64x32xf32>
    %cst_89 = arith.constant dense<0.000000e+00> : vector<64x32xf32>
    %123 = tpu.matmul %2, %118, %cst_89 {dimension_numbers = #tpu.dot_dimension_numbers<[1], [0], [0], [1], [0, 0, 1, 1], [], []>} : vector<64x64xbf16>, vector<64x32xbf16>, vector<64x32xf32> -> vector<64x32xf32>
    %124 = arith.addf %123, %117 : vector<64x32xf32>
    %125 = tpu.concatenate %120, %122, %124 in 1 : vector<64x32xf32>, vector<64x32xf32>, vector<64x32xf32> -> vector<64x96xf32>
    %126 = arith.truncf %125 : vector<64x96xf32> to vector<64x96xbf16>
    %127 = vector.extract_strided_slice %126 {offsets = [0, 0], sizes = [16, 96], strides = [1, 1]} : vector<64x96xbf16> to vector<16x96xbf16>
    %c3 = arith.constant 3 : index
    %c0_90 = arith.constant 0 : index
    %c0_91 = arith.constant 0 : index
    %128 = vector.load %arg9[%c3, %c0_90, %c0_91] : memref<6x96x96xbf16, #tpu.memory_space<vmem>>, vector<1x96x96xbf16>
    %129 = vector.shape_cast %128 : vector<1x96x96xbf16> to vector<96x96xbf16>
    %cst_92 = arith.constant dense<0.000000e+00> : vector<16x96xf32>
    %130 = tpu.matmul %127, %129, %cst_92 {dimension_numbers = #tpu.dot_dimension_numbers<[1], [0], [0], [1], [0, 0, 1, 1], [], []>} : vector<16x96xbf16>, vector<96x96xbf16>, vector<16x96xf32> -> vector<16x96xf32>
    %c3_93 = arith.constant 3 : index
    %c0_94 = arith.constant 0 : index
    %c0_95 = arith.constant 0 : index
    %131 = vector.load %arg10[%c3_93, %c0_94, %c0_95] : memref<6x1x96xf32, #tpu.memory_space<vmem>>, vector<1x1x96xf32>
    %132 = vector.shape_cast %131 : vector<1x1x96xf32> to vector<1x96xf32>
    %133 = vector.broadcast %132 : vector<1x96xf32> to vector<16x96xf32>
    %134 = arith.addf %130, %133 : vector<16x96xf32>
    %cst_96 = arith.constant 0.000000e+00 : f32
    %135 = vector.broadcast %cst_96 : f32 to vector<16x96xf32>
    %136 = arith.maximumf %134, %135 : vector<16x96xf32>
    %137 = arith.truncf %136 : vector<16x96xf32> to vector<16x96xbf16>
    %c3_97 = arith.constant 3 : index
    %c0_98 = arith.constant 0 : index
    %c0_99 = arith.constant 0 : index
    %138 = vector.load %arg11[%c3_97, %c0_98, %c0_99] : memref<6x96x96xbf16, #tpu.memory_space<vmem>>, vector<1x96x96xbf16>
    %139 = vector.shape_cast %138 : vector<1x96x96xbf16> to vector<96x96xbf16>
    %cst_100 = arith.constant dense<0.000000e+00> : vector<16x96xf32>
    %140 = tpu.matmul %137, %139, %cst_100 {dimension_numbers = #tpu.dot_dimension_numbers<[1], [0], [0], [1], [0, 0, 1, 1], [], []>} : vector<16x96xbf16>, vector<96x96xbf16>, vector<16x96xf32> -> vector<16x96xf32>
    %c3_101 = arith.constant 3 : index
    %c0_102 = arith.constant 0 : index
    %c0_103 = arith.constant 0 : index
    %141 = vector.load %arg12[%c3_101, %c0_102, %c0_103] : memref<6x1x96xf32, #tpu.memory_space<vmem>>, vector<1x1x96xf32>
    %142 = vector.shape_cast %141 : vector<1x1x96xf32> to vector<1x96xf32>
    %143 = vector.broadcast %142 : vector<1x96xf32> to vector<16x96xf32>
    %144 = arith.addf %140, %143 : vector<16x96xf32>
    %cst_104 = arith.constant 0.000000e+00 : f32
    %145 = vector.broadcast %cst_104 : f32 to vector<16x96xf32>
    %146 = arith.maximumf %144, %145 : vector<16x96xf32>
    %147 = arith.truncf %146 : vector<16x96xf32> to vector<16x96xbf16>
    %c3_105 = arith.constant 3 : index
    %c0_106 = arith.constant 0 : index
    %c0_107 = arith.constant 0 : index
    %148 = vector.load %arg13[%c3_105, %c0_106, %c0_107] : memref<6x96x32xbf16, #tpu.memory_space<vmem>>, vector<1x96x32xbf16>
    %149 = vector.shape_cast %148 : vector<1x96x32xbf16> to vector<96x32xbf16>
    %cst_108 = arith.constant dense<0.000000e+00> : vector<16x32xf32>
    %150 = tpu.matmul %147, %149, %cst_108 {dimension_numbers = #tpu.dot_dimension_numbers<[1], [0], [0], [1], [0, 0, 1, 1], [], []>} : vector<16x96xbf16>, vector<96x32xbf16>, vector<16x32xf32> -> vector<16x32xf32>
    %c3_109 = arith.constant 3 : index
    %c0_110 = arith.constant 0 : index
    %c0_111 = arith.constant 0 : index
    %151 = vector.load %arg14[%c3_109, %c0_110, %c0_111] : memref<6x1x32xf32, #tpu.memory_space<vmem>>, vector<1x1x32xf32>
    %152 = vector.shape_cast %151 : vector<1x1x32xf32> to vector<1x32xf32>
    %153 = vector.broadcast %152 : vector<1x32xf32> to vector<16x32xf32>
    %154 = arith.addf %150, %153 : vector<16x32xf32>
    %cst_112 = arith.constant 0.000000e+00 : f32
    %155 = vector.broadcast %cst_112 : f32 to vector<16x32xf32>
    %156 = arith.maximumf %154, %155 : vector<16x32xf32>
    %157 = vector.extract_strided_slice %126 {offsets = [16, 0], sizes = [32, 96], strides = [1, 1]} : vector<64x96xbf16> to vector<32x96xbf16>
    %c4 = arith.constant 4 : index
    %c0_113 = arith.constant 0 : index
    %c0_114 = arith.constant 0 : index
    %158 = vector.load %arg9[%c4, %c0_113, %c0_114] : memref<6x96x96xbf16, #tpu.memory_space<vmem>>, vector<1x96x96xbf16>
    %159 = vector.shape_cast %158 : vector<1x96x96xbf16> to vector<96x96xbf16>
    %cst_115 = arith.constant dense<0.000000e+00> : vector<32x96xf32>
    %160 = tpu.matmul %157, %159, %cst_115 {dimension_numbers = #tpu.dot_dimension_numbers<[1], [0], [0], [1], [0, 0, 1, 1], [], []>} : vector<32x96xbf16>, vector<96x96xbf16>, vector<32x96xf32> -> vector<32x96xf32>
    %c4_116 = arith.constant 4 : index
    %c0_117 = arith.constant 0 : index
    %c0_118 = arith.constant 0 : index
    %161 = vector.load %arg10[%c4_116, %c0_117, %c0_118] : memref<6x1x96xf32, #tpu.memory_space<vmem>>, vector<1x1x96xf32>
    %162 = vector.shape_cast %161 : vector<1x1x96xf32> to vector<1x96xf32>
    %163 = vector.broadcast %162 : vector<1x96xf32> to vector<32x96xf32>
    %164 = arith.addf %160, %163 : vector<32x96xf32>
    %cst_119 = arith.constant 0.000000e+00 : f32
    %165 = vector.broadcast %cst_119 : f32 to vector<32x96xf32>
    %166 = arith.maximumf %164, %165 : vector<32x96xf32>
    %167 = arith.truncf %166 : vector<32x96xf32> to vector<32x96xbf16>
    %c4_120 = arith.constant 4 : index
    %c0_121 = arith.constant 0 : index
    %c0_122 = arith.constant 0 : index
    %168 = vector.load %arg11[%c4_120, %c0_121, %c0_122] : memref<6x96x96xbf16, #tpu.memory_space<vmem>>, vector<1x96x96xbf16>
    %169 = vector.shape_cast %168 : vector<1x96x96xbf16> to vector<96x96xbf16>
    %cst_123 = arith.constant dense<0.000000e+00> : vector<32x96xf32>
    %170 = tpu.matmul %167, %169, %cst_123 {dimension_numbers = #tpu.dot_dimension_numbers<[1], [0], [0], [1], [0, 0, 1, 1], [], []>} : vector<32x96xbf16>, vector<96x96xbf16>, vector<32x96xf32> -> vector<32x96xf32>
    %c4_124 = arith.constant 4 : index
    %c0_125 = arith.constant 0 : index
    %c0_126 = arith.constant 0 : index
    %171 = vector.load %arg12[%c4_124, %c0_125, %c0_126] : memref<6x1x96xf32, #tpu.memory_space<vmem>>, vector<1x1x96xf32>
    %172 = vector.shape_cast %171 : vector<1x1x96xf32> to vector<1x96xf32>
    %173 = vector.broadcast %172 : vector<1x96xf32> to vector<32x96xf32>
    %174 = arith.addf %170, %173 : vector<32x96xf32>
    %cst_127 = arith.constant 0.000000e+00 : f32
    %175 = vector.broadcast %cst_127 : f32 to vector<32x96xf32>
    %176 = arith.maximumf %174, %175 : vector<32x96xf32>
    %177 = arith.truncf %176 : vector<32x96xf32> to vector<32x96xbf16>
    %c4_128 = arith.constant 4 : index
    %c0_129 = arith.constant 0 : index
    %c0_130 = arith.constant 0 : index
    %178 = vector.load %arg13[%c4_128, %c0_129, %c0_130] : memref<6x96x32xbf16, #tpu.memory_space<vmem>>, vector<1x96x32xbf16>
    %179 = vector.shape_cast %178 : vector<1x96x32xbf16> to vector<96x32xbf16>
    %cst_131 = arith.constant dense<0.000000e+00> : vector<32x32xf32>
    %180 = tpu.matmul %177, %179, %cst_131 {dimension_numbers = #tpu.dot_dimension_numbers<[1], [0], [0], [1], [0, 0, 1, 1], [], []>} : vector<32x96xbf16>, vector<96x32xbf16>, vector<32x32xf32> -> vector<32x32xf32>
    %c4_132 = arith.constant 4 : index
    %c0_133 = arith.constant 0 : index
    %c0_134 = arith.constant 0 : index
    %181 = vector.load %arg14[%c4_132, %c0_133, %c0_134] : memref<6x1x32xf32, #tpu.memory_space<vmem>>, vector<1x1x32xf32>
    %182 = vector.shape_cast %181 : vector<1x1x32xf32> to vector<1x32xf32>
    %183 = vector.broadcast %182 : vector<1x32xf32> to vector<32x32xf32>
    %184 = arith.addf %180, %183 : vector<32x32xf32>
    %cst_135 = arith.constant 0.000000e+00 : f32
    %185 = vector.broadcast %cst_135 : f32 to vector<32x32xf32>
    %186 = arith.maximumf %184, %185 : vector<32x32xf32>
    %187 = vector.extract_strided_slice %126 {offsets = [48, 0], sizes = [16, 96], strides = [1, 1]} : vector<64x96xbf16> to vector<16x96xbf16>
    %c5 = arith.constant 5 : index
    %c0_136 = arith.constant 0 : index
    %c0_137 = arith.constant 0 : index
    %188 = vector.load %arg9[%c5, %c0_136, %c0_137] : memref<6x96x96xbf16, #tpu.memory_space<vmem>>, vector<1x96x96xbf16>
    %189 = vector.shape_cast %188 : vector<1x96x96xbf16> to vector<96x96xbf16>
    %cst_138 = arith.constant dense<0.000000e+00> : vector<16x96xf32>
    %190 = tpu.matmul %187, %189, %cst_138 {dimension_numbers = #tpu.dot_dimension_numbers<[1], [0], [0], [1], [0, 0, 1, 1], [], []>} : vector<16x96xbf16>, vector<96x96xbf16>, vector<16x96xf32> -> vector<16x96xf32>
    %c5_139 = arith.constant 5 : index
    %c0_140 = arith.constant 0 : index
    %c0_141 = arith.constant 0 : index
    %191 = vector.load %arg10[%c5_139, %c0_140, %c0_141] : memref<6x1x96xf32, #tpu.memory_space<vmem>>, vector<1x1x96xf32>
    %192 = vector.shape_cast %191 : vector<1x1x96xf32> to vector<1x96xf32>
    %193 = vector.broadcast %192 : vector<1x96xf32> to vector<16x96xf32>
    %194 = arith.addf %190, %193 : vector<16x96xf32>
    %cst_142 = arith.constant 0.000000e+00 : f32
    %195 = vector.broadcast %cst_142 : f32 to vector<16x96xf32>
    %196 = arith.maximumf %194, %195 : vector<16x96xf32>
    %197 = arith.truncf %196 : vector<16x96xf32> to vector<16x96xbf16>
    %c5_143 = arith.constant 5 : index
    %c0_144 = arith.constant 0 : index
    %c0_145 = arith.constant 0 : index
    %198 = vector.load %arg11[%c5_143, %c0_144, %c0_145] : memref<6x96x96xbf16, #tpu.memory_space<vmem>>, vector<1x96x96xbf16>
    %199 = vector.shape_cast %198 : vector<1x96x96xbf16> to vector<96x96xbf16>
    %cst_146 = arith.constant dense<0.000000e+00> : vector<16x96xf32>
    %200 = tpu.matmul %197, %199, %cst_146 {dimension_numbers = #tpu.dot_dimension_numbers<[1], [0], [0], [1], [0, 0, 1, 1], [], []>} : vector<16x96xbf16>, vector<96x96xbf16>, vector<16x96xf32> -> vector<16x96xf32>
    %c5_147 = arith.constant 5 : index
    %c0_148 = arith.constant 0 : index
    %c0_149 = arith.constant 0 : index
    %201 = vector.load %arg12[%c5_147, %c0_148, %c0_149] : memref<6x1x96xf32, #tpu.memory_space<vmem>>, vector<1x1x96xf32>
    %202 = vector.shape_cast %201 : vector<1x1x96xf32> to vector<1x96xf32>
    %203 = vector.broadcast %202 : vector<1x96xf32> to vector<16x96xf32>
    %204 = arith.addf %200, %203 : vector<16x96xf32>
    %cst_150 = arith.constant 0.000000e+00 : f32
    %205 = vector.broadcast %cst_150 : f32 to vector<16x96xf32>
    %206 = arith.maximumf %204, %205 : vector<16x96xf32>
    %207 = arith.truncf %206 : vector<16x96xf32> to vector<16x96xbf16>
    %c5_151 = arith.constant 5 : index
    %c0_152 = arith.constant 0 : index
    %c0_153 = arith.constant 0 : index
    %208 = vector.load %arg13[%c5_151, %c0_152, %c0_153] : memref<6x96x32xbf16, #tpu.memory_space<vmem>>, vector<1x96x32xbf16>
    %209 = vector.shape_cast %208 : vector<1x96x32xbf16> to vector<96x32xbf16>
    %cst_154 = arith.constant dense<0.000000e+00> : vector<16x32xf32>
    %210 = tpu.matmul %207, %209, %cst_154 {dimension_numbers = #tpu.dot_dimension_numbers<[1], [0], [0], [1], [0, 0, 1, 1], [], []>} : vector<16x96xbf16>, vector<96x32xbf16>, vector<16x32xf32> -> vector<16x32xf32>
    %c5_155 = arith.constant 5 : index
    %c0_156 = arith.constant 0 : index
    %c0_157 = arith.constant 0 : index
    %211 = vector.load %arg14[%c5_155, %c0_156, %c0_157] : memref<6x1x32xf32, #tpu.memory_space<vmem>>, vector<1x1x32xf32>
    %212 = vector.shape_cast %211 : vector<1x1x32xf32> to vector<1x32xf32>
    %213 = vector.broadcast %212 : vector<1x32xf32> to vector<16x32xf32>
    %214 = arith.addf %210, %213 : vector<16x32xf32>
    %cst_158 = arith.constant 0.000000e+00 : f32
    %215 = vector.broadcast %cst_158 : f32 to vector<16x32xf32>
    %216 = arith.maximumf %214, %215 : vector<16x32xf32>
    %217 = tpu.concatenate %156, %186, %216 in 0 : vector<16x32xf32>, vector<32x32xf32>, vector<16x32xf32> -> vector<64x32xf32>
    %218 = arith.truncf %217 : vector<64x32xf32> to vector<64x32xbf16>
    %c0_159 = arith.constant 0 : index
    %c0_160 = arith.constant 0 : index
    %219 = vector.load %arg4[%c0_159, %c0_160] : memref<2x16xbf16, #tpu.memory_space<vmem>>, vector<2x16xbf16>
    %220 = vector.extract_strided_slice %218 {offsets = [0, 0], sizes = [16, 32], strides = [1, 1]} : vector<64x32xbf16> to vector<16x32xbf16>
    %cst_161 = arith.constant dense<0.000000e+00> : vector<2x32xf32>
    %221 = tpu.matmul %219, %220, %cst_161 {dimension_numbers = #tpu.dot_dimension_numbers<[1], [0], [0], [1], [0, 0, 1, 1], [], []>} : vector<2x16xbf16>, vector<16x32xbf16>, vector<2x32xf32> -> vector<2x32xf32>
    %c0_162 = arith.constant 0 : index
    %c0_163 = arith.constant 0 : index
    %222 = vector.load %arg5[%c0_162, %c0_163] : memref<2x32xbf16, #tpu.memory_space<vmem>>, vector<2x32xbf16>
    %223 = vector.extract_strided_slice %218 {offsets = [16, 0], sizes = [32, 32], strides = [1, 1]} : vector<64x32xbf16> to vector<32x32xbf16>
    %cst_164 = arith.constant dense<0.000000e+00> : vector<2x32xf32>
    %224 = tpu.matmul %222, %223, %cst_164 {dimension_numbers = #tpu.dot_dimension_numbers<[1], [0], [0], [1], [0, 0, 1, 1], [], []>} : vector<2x32xbf16>, vector<32x32xbf16>, vector<2x32xf32> -> vector<2x32xf32>
    %c0_165 = arith.constant 0 : index
    %c0_166 = arith.constant 0 : index
    %225 = vector.load %arg6[%c0_165, %c0_166] : memref<2x16xbf16, #tpu.memory_space<vmem>>, vector<2x16xbf16>
    %226 = vector.extract_strided_slice %218 {offsets = [48, 0], sizes = [16, 32], strides = [1, 1]} : vector<64x32xbf16> to vector<16x32xbf16>
    %cst_167 = arith.constant dense<0.000000e+00> : vector<2x32xf32>
    %227 = tpu.matmul %225, %226, %cst_167 {dimension_numbers = #tpu.dot_dimension_numbers<[1], [0], [0], [1], [0, 0, 1, 1], [], []>} : vector<2x16xbf16>, vector<16x32xbf16>, vector<2x32xf32> -> vector<2x32xf32>
    %228 = tpu.concatenate %221, %224, %227 in 1 : vector<2x32xf32>, vector<2x32xf32>, vector<2x32xf32> -> vector<2x96xf32>
    %229 = arith.truncf %228 : vector<2x96xf32> to vector<2x96xbf16>
    %c0_168 = arith.constant 0 : index
    %c0_169 = arith.constant 0 : index
    %230 = vector.load %arg15[%c0_168, %c0_169] : memref<96x192xbf16, #tpu.memory_space<vmem>>, vector<96x192xbf16>
    %cst_170 = arith.constant dense<0.000000e+00> : vector<2x192xf32>
    %231 = tpu.matmul %229, %230, %cst_170 {dimension_numbers = #tpu.dot_dimension_numbers<[1], [0], [0], [1], [0, 0, 1, 1], [], []>} : vector<2x96xbf16>, vector<96x192xbf16>, vector<2x192xf32> -> vector<2x192xf32>
    %c0_171 = arith.constant 0 : index
    %c0_172 = arith.constant 0 : index
    %232 = vector.load %arg16[%c0_171, %c0_172] : memref<1x192xf32, #tpu.memory_space<vmem>>, vector<1x192xf32>
    %233 = vector.broadcast %232 : vector<1x192xf32> to vector<2x192xf32>
    %234 = arith.addf %231, %233 : vector<2x192xf32>
    %cst_173 = arith.constant 0.000000e+00 : f32
    %235 = vector.broadcast %cst_173 : f32 to vector<2x192xf32>
    %236 = arith.maximumf %234, %235 : vector<2x192xf32>
    %237 = arith.truncf %236 : vector<2x192xf32> to vector<2x192xbf16>
    %c0_174 = arith.constant 0 : index
    %c0_175 = arith.constant 0 : index
    %238 = vector.load %arg17[%c0_174, %c0_175] : memref<192x3xbf16, #tpu.memory_space<vmem>>, vector<192x3xbf16>
    %cst_176 = arith.constant dense<0.000000e+00> : vector<2x3xf32>
    %239 = tpu.matmul %237, %238, %cst_176 {dimension_numbers = #tpu.dot_dimension_numbers<[1], [0], [0], [1], [0, 0, 1, 1], [], []>} : vector<2x192xbf16>, vector<192x3xbf16>, vector<2x3xf32> -> vector<2x3xf32>
    %c0_177 = arith.constant 0 : index
    %c0_178 = arith.constant 0 : index
    %240 = vector.load %arg18[%c0_177, %c0_178] : memref<1x3xf32, #tpu.memory_space<vmem>>, vector<1x3xf32>
    %241 = vector.broadcast %240 : vector<1x3xf32> to vector<2x3xf32>
    %242 = arith.addf %239, %241 : vector<2x3xf32>
    %c0_179 = arith.constant 0 : index
    %c0_180 = arith.constant 0 : index
    %243 = vector.load %arg19[%c0_179, %c0_180] : memref<2x3xf32, #tpu.memory_space<vmem>>, vector<2x3xf32>
    tpu.vector_store %arg19[%c0_179, %c0_180], %242 {strides = array<i32>} : memref<2x3xf32, #tpu.memory_space<vmem>>, vector<2x3xf32>,
    return
  }
}

</mosaic_0001>

<llo_original>
// kernel: tpu_custom_call.1
$region0: #{tpu_custom_call.1}
  #allocation0 [shape = 'u32[]', space=smem, size = 0x4, offset = 0x4, fixed_abs, tag = 'smem constant byte address 0x4 - core index']
  #allocation1 [shape = 'u32[72,128]{1,0:T(1,128)}', space=vmem, size = 0x9000, scoped, tag = 'internal scratch']
  %s0 = inlined_call_operand.vmem [shape: f32[16,8], index: 0, kind: input, shape index: {}]
  %s1 = inlined_call_operand.vmem [shape: bf16[64,64], index: 1, kind: input, shape index: {}]
  %s2 = inlined_call_operand.hbm [shape: bf16[64,64], index: 2, kind: input, shape index: {}]
  %s3 = inlined_call_operand.hbm [shape: bf16[64,64], index: 3, kind: input, shape index: {}]
  %s4 = inlined_call_operand.vmem [shape: bf16[2,16], index: 4, kind: input, shape index: {}]
  %s5 = inlined_call_operand.hbm [shape: bf16[2,32], index: 5, kind: input, shape index: {}]
  %s6 = inlined_call_operand.hbm [shape: bf16[2,16], index: 6, kind: input, shape index: {}]
  %s7 = inlined_call_operand.vmem [shape: bf16[8,32], index: 7, kind: input, shape index: {}]
  %s8 = inlined_call_operand.hbm [shape: f32[1,32], index: 8, kind: input, shape index: {}]
  %s9 = inlined_call_operand.vmem [shape: bf16[6,96,96], index: 9, kind: input, shape index: {}]
  %s10 = inlined_call_operand.hbm [shape: f32[6,1,96], index: 10, kind: input, shape index: {}]
  %s11 = inlined_call_operand.hbm [shape: bf16[6,96,96], index: 11, kind: input, shape index: {}]
  %s12 = inlined_call_operand.hbm [shape: f32[6,1,96], index: 12, kind: input, shape index: {}]
  %s13 = inlined_call_operand.vmem [shape: bf16[6,96,32], index: 13, kind: input, shape index: {}]
  %s14 = inlined_call_operand.hbm [shape: f32[6,1,32], index: 14, kind: input, shape index: {}]
  %s15 = inlined_call_operand.vmem [shape: bf16[96,192], index: 15, kind: input, shape index: {}]
  %s16 = inlined_call_operand.hbm [shape: f32[1,192], index: 16, kind: input, shape index: {}]
  %s17 = inlined_call_operand.vmem [shape: bf16[192,3], index: 17, kind: input, shape index: {}]
  %s18 = inlined_call_operand.vmem [shape: f32[1,3], index: 18, kind: input, shape index: {}]
  %s19 = inlined_call_operand.hbm [shape: f32[2,3], index: 19, kind: output, shape index: {}]
  %s20 = sld [smem:[#allocation0]]
  $region126: #{tpu_custom_call.1} parent=0
    _
  %s22 = ssub.s32 1, %s20
  %s23 = scalar_select 0, %s22, %s20
  $region1: #{tpu_custom_call.1} parent=0
    #allocation2 [shape = 'u8[16384]{0}', space=vmem, size = 0x4000, scoped, tag = 'input window, operand 2, single buffered']
    #allocation3 [shape = 's32[1]{0}', space=sflag, size = 0x4, scoped, tag = 'scoped memory for tpu_custom_call.1']
    #allocation4 [shape = 's32[1]{0}', space=sflag, size = 0x4, scoped, tag = 'scoped memory for tpu_custom_call.1']
    #allocation5 [shape = 'u8[16384]{0}', space=vmem, size = 0x4000, scoped, tag = 'input window, operand 3, single buffered']
    #allocation6 [shape = 's32[1]{0}', space=sflag, size = 0x4, scoped, tag = 'scoped memory for tpu_custom_call.1']
    #allocation7 [shape = 'u8[512]{0}', space=vmem, size = 0x400, scoped, tag = 'input window, operand 5, single buffered']
    #allocation8 [shape = 'u8[512]{0}', space=vmem, size = 0x400, scoped, tag = 'input window, operand 6, single buffered']
    #allocation9 [shape = 's32[1]{0}', space=sflag, size = 0x4, scoped, tag = 'scoped memory for tpu_custom_call.1']
    #allocation10 [shape = 'u8[512]{0}', space=vmem, size = 0x400, scoped, tag = 'input window, operand 8, single buffered']
    #allocation11 [shape = 'u8[3072]{0}', space=vmem, size = 0xc00, scoped, tag = 'input window, operand 10, single buffered']
    #allocation12 [shape = 's32[1]{0}', space=sflag, size = 0x4, scoped, tag = 'scoped memory for tpu_custom_call.1']
    #allocation13 [shape = 'u8[147456]{0}', space=vmem, size = 0x24000, scoped, tag = 'input window, operand 11, single buffered']
    #allocation14 [shape = 'u8[3072]{0}', space=vmem, size = 0xc00, scoped, tag = 'input window, operand 12, single buffered']
    #allocation15 [shape = 's32[1]{0}', space=sflag, size = 0x4, scoped, tag = 'scoped memory for tpu_custom_call.1']
    #allocation16 [shape = 'u8[3072]{0}', space=vmem, size = 0xc00, scoped, tag = 'input window, operand 14, single buffered']
    #allocation17 [shape = 'u8[1024]{0}', space=vmem, size = 0x400, scoped, tag = 'input window, operand 16, single buffered']
    #allocation18 [shape = 's32[1]{0}', space=sflag, size = 0x4, scoped, tag = 'scoped memory for tpu_custom_call.1']
    #allocation19 [shape = 'u8[1024]{0}', space=vmem, size = 0x400, scoped, tag = 'output window, operand 0, single buffered']
    %24 = vsyncpa [#allocation3], 0
    %25 = vsyncpa [#allocation6], 0
    %26 = vsyncpa [#allocation9], 0
    %27 = vsyncpa [#allocation12], 0
    %28 = vsyncpa [#allocation15], 0
    %29 = vsyncpa [#allocation18], 0
    %30 = vsyncpa [#allocation4], 0
    // Predicated region
    $region2: #{tpu_custom_call.1} parent=1 // pred_check
      _
    $region3: #{tpu_custom_call.1} parent=1 // pred_check_branch
      %32 = sbr.rel (0) target = $region5
    $region4: #{tpu_custom_call.1} parent=1 // pred_region
      _
    $region5: #{tpu_custom_call.1} parent=1 // pred_fallthru
      _
    // Predicated region
    $region6: #{tpu_custom_call.1} parent=1 // pred_check
      _
    $region7: #{tpu_custom_call.1} parent=1 // pred_check_branch
      %34 = sbr.rel (0) target = $region9
    $region8: #{tpu_custom_call.1} parent=1 // pred_region
      _
    $region9: #{tpu_custom_call.1} parent=1 // pred_fallthru
      _
    // Predicated region
    $region10: #{tpu_custom_call.1} parent=1 // pred_check
      _
    $region11: #{tpu_custom_call.1} parent=1 // pred_check_branch
      %36 = sbr.rel (0) target = $region13
    $region12: #{tpu_custom_call.1} parent=1 // pred_region
      %38 = vsyncadd [#allocation3], 0
      %s39 = sshll.u32 %s2, 4
      %s40 = int_to_ptr.hbm [resolvable:$true] %s39
      %s41 = sshll.u32 [#allocation2], 4
      %s42 = int_to_ptr.vmem [resolvable:$true] %s41
      %47 = dma.hbm_to_vmem [thread:$0]  %s40, 512, %s42, [#allocation3], 64, 64, 4
    $region13: #{tpu_custom_call.1} parent=1 // pred_fallthru
      _
    // Predicated region
    $region14: #{tpu_custom_call.1} parent=1 // pred_check
      _
    $region15: #{tpu_custom_call.1} parent=1 // pred_check_branch
      %49 = sbr.rel (0) target = $region17
    $region16: #{tpu_custom_call.1} parent=1 // pred_region
      %51 = vsyncadd [#allocation6], 0
      %s52 = sshll.u32 %s3, 4
      %s53 = int_to_ptr.hbm [resolvable:$true] %s52
      %s54 = sshll.u32 [#allocation5], 4
      %s55 = int_to_ptr.vmem [resolvable:$true] %s54
      %60 = dma.hbm_to_vmem [thread:$0]  %s53, 512, %s55, [#allocation6], 64, 64, 4
    $region17: #{tpu_custom_call.1} parent=1 // pred_fallthru
      _
    // Predicated region
    $region18: #{tpu_custom_call.1} parent=1 // pred_check
      _
    $region19: #{tpu_custom_call.1} parent=1 // pred_check_branch
      %62 = sbr.rel (0) target = $region21
    $region20: #{tpu_custom_call.1} parent=1 // pred_region
      _
    $region21: #{tpu_custom_call.1} parent=1 // pred_fallthru
      _
    // Predicated region
    $region22: #{tpu_custom_call.1} parent=1 // pred_check
      _
    $region23: #{tpu_custom_call.1} parent=1 // pred_check_branch
      %64 = sbr.rel (0) target = $region25
    $region24: #{tpu_custom_call.1} parent=1 // pred_region
      %66 = vsyncadd [#allocation6], 0
      %s68 = sshll.u32 %s5, 4
      %s69 = int_to_ptr.hbm [resolvable:$true] %s68
      %s70 = sshll.u32 [#allocation7], 4
      %s71 = int_to_ptr.vmem [resolvable:$true] %s70
      %73 = dma.hbm_to_vmem [thread:$0]  %s69, 16, %s71, [#allocation6]
    $region25: #{tpu_custom_call.1} parent=1 // pred_fallthru
      _
    // Predicated region
    $region26: #{tpu_custom_call.1} parent=1 // pred_check
      _
    $region27: #{tpu_custom_call.1} parent=1 // pred_check_branch
      %75 = sbr.rel (0) target = $region29
    $region28: #{tpu_custom_call.1} parent=1 // pred_region
      %77 = vsyncadd [#allocation9], 0
      %s79 = sshll.u32 %s6, 4
      %s80 = int_to_ptr.hbm [resolvable:$true] %s79
      %s81 = sshll.u32 [#allocation8], 4
      %s82 = int_to_ptr.vmem [resolvable:$true] %s81
      %84 = dma.hbm_to_vmem [thread:$0]  %s80, 16, %s82, [#allocation9]
    $region29: #{tpu_custom_call.1} parent=1 // pred_fallthru
      _
    // Predicated region
    $region30: #{tpu_custom_call.1} parent=1 // pred_check
      _
    $region31: #{tpu_custom_call.1} parent=1 // pred_check_branch
      %86 = sbr.rel (0) target = $region33
    $region32: #{tpu_custom_call.1} parent=1 // pred_region
      _
    $region33: #{tpu_custom_call.1} parent=1 // pred_fallthru
      _
    // Predicated region
    $region34: #{tpu_custom_call.1} parent=1 // pred_check
      _
    $region35: #{tpu_custom_call.1} parent=1 // pred_check_branch
      %88 = sbr.rel (0) target = $region37
    $region36: #{tpu_custom_call.1} parent=1 // pred_region
      %90 = vsyncadd [#allocation9], 0
      %s92 = sshll.u32 %s8, 4
      %s93 = int_to_ptr.hbm [resolvable:$true] %s92
      %s94 = sshll.u32 [#allocation10], 4
      %s95 = int_to_ptr.vmem [resolvable:$true] %s94
      %97 = dma.hbm_to_vmem [thread:$0]  %s93, 16, %s95, [#allocation9]
    $region37: #{tpu_custom_call.1} parent=1 // pred_fallthru
      _
    // Predicated region
    $region38: #{tpu_custom_call.1} parent=1 // pred_check
      _
    $region39: #{tpu_custom_call.1} parent=1 // pred_check_branch
      %99 = sbr.rel (0) target = $region41
    $region40: #{tpu_custom_call.1} parent=1 // pred_region
      _
    $region41: #{tpu_custom_call.1} parent=1 // pred_fallthru
      _
    // Predicated region
    $region42: #{tpu_custom_call.1} parent=1 // pred_check
      _
    $region43: #{tpu_custom_call.1} parent=1 // pred_check_branch
      %101 = sbr.rel (0) target = $region45
    $region44: #{tpu_custom_call.1} parent=1 // pred_region
      %103 = vsyncadd [#allocation12], 0
      %s104 = sshll.u32 %s10, 4
      %s105 = int_to_ptr.hbm [resolvable:$true] %s104
      %s106 = sshll.u32 [#allocation11], 4
      %s107 = int_to_ptr.vmem [resolvable:$true] %s106
      %112 = dma.hbm_to_vmem [thread:$0]  %s105, 96, %s107, [#allocation12], 16, 16, 1
    $region45: #{tpu_custom_call.1} parent=1 // pred_fallthru
      _
    // Predicated region
    $region46: #{tpu_custom_call.1} parent=1 // pred_check
      _
    $region47: #{tpu_custom_call.1} parent=1 // pred_check_branch
      %114 = sbr.rel (0) target = $region49
    $region48: #{tpu_custom_call.1} parent=1 // pred_region
      %116 = vsyncadd [#allocation12], 0
      %s117 = sshll.u32 %s11, 4
      %s118 = int_to_ptr.hbm [resolvable:$true] %s117
      %s119 = sshll.u32 [#allocation13], 4
      %s120 = int_to_ptr.vmem [resolvable:$true] %s119
      %125 = dma.hbm_to_vmem [thread:$0]  %s118, 4608, %s120, [#allocation12], 64, 64, 4
    $region49: #{tpu_custom_call.1} parent=1 // pred_fallthru
      _
    // Predicated region
    $region50: #{tpu_custom_call.1} parent=1 // pred_check
      _
    $region51: #{tpu_custom_call.1} parent=1 // pred_check_branch
      %127 = sbr.rel (0) target = $region53
    $region52: #{tpu_custom_call.1} parent=1 // pred_region
      %129 = vsyncadd [#allocation15], 0
      %s130 = sshll.u32 %s12, 4
      %s131 = int_to_ptr.hbm [resolvable:$true] %s130
      %s132 = sshll.u32 [#allocation14], 4
      %s133 = int_to_ptr.vmem [resolvable:$true] %s132
      %138 = dma.hbm_to_vmem [thread:$0]  %s131, 96, %s133, [#allocation15], 16, 16, 1
    $region53: #{tpu_custom_call.1} parent=1 // pred_fallthru
      _
    // Predicated region
    $region54: #{tpu_custom_call.1} parent=1 // pred_check
      _
    $region55: #{tpu_custom_call.1} parent=1 // pred_check_branch
      %140 = sbr.rel (0) target = $region57
    $region56: #{tpu_custom_call.1} parent=1 // pred_region
      _
    $region57: #{tpu_custom_call.1} parent=1 // pred_fallthru
      _
    // Predicated region
    $region58: #{tpu_custom_call.1} parent=1 // pred_check
      _
    $region59: #{tpu_custom_call.1} parent=1 // pred_check_branch
      %142 = sbr.rel (0) target = $region61
    $region60: #{tpu_custom_call.1} parent=1 // pred_region
      %144 = vsyncadd [#allocation15], 0
      %s145 = sshll.u32 %s14, 4
      %s146 = int_to_ptr.hbm [resolvable:$true] %s145
      %s147 = sshll.u32 [#allocation16], 4
      %s148 = int_to_ptr.vmem [resolvable:$true] %s147
      %153 = dma.hbm_to_vmem [thread:$0]  %s146, 96, %s148, [#allocation15], 16, 16, 1
    $region61: #{tpu_custom_call.1} parent=1 // pred_fallthru
      _
    // Predicated region
    $region62: #{tpu_custom_call.1} parent=1 // pred_check
      _
    $region63: #{tpu_custom_call.1} parent=1 // pred_check_branch
      %155 = sbr.rel (0) target = $region65
    $region64: #{tpu_custom_call.1} parent=1 // pred_region
      _
    $region65: #{tpu_custom_call.1} parent=1 // pred_fallthru
      _
    // Predicated region
    $region66: #{tpu_custom_call.1} parent=1 // pred_check
      _
    $region67: #{tpu_custom_call.1} parent=1 // pred_check_branch
      %157 = sbr.rel (0) target = $region69
    $region68: #{tpu_custom_call.1} parent=1 // pred_region
      %159 = vsyncadd [#allocation18], 0
      %s161 = sshll.u32 %s16, 4
      %s162 = int_to_ptr.hbm [resolvable:$true] %s161
      %s163 = sshll.u32 [#allocation17], 4
      %s164 = int_to_ptr.vmem [resolvable:$true] %s163
      %166 = dma.hbm_to_vmem [thread:$0]  %s162, 32, %s164, [#allocation18]
    $region69: #{tpu_custom_call.1} parent=1 // pred_fallthru
      _
    // Predicated region
    $region70: #{tpu_custom_call.1} parent=1 // pred_check
      _
    $region71: #{tpu_custom_call.1} parent=1 // pred_check_branch
      %168 = sbr.rel (0) target = $region73
    $region72: #{tpu_custom_call.1} parent=1 // pred_region
      _
    $region73: #{tpu_custom_call.1} parent=1 // pred_fallthru
      _
    // Predicated region
    $region74: #{tpu_custom_call.1} parent=1 // pred_check
      _
    $region75: #{tpu_custom_call.1} parent=1 // pred_check_branch
      %170 = sbr.rel (0) target = $region77
    $region76: #{tpu_custom_call.1} parent=1 // pred_region
      _
    $region77: #{tpu_custom_call.1} parent=1 // pred_fallthru
      _
    // Predicated region
    $region78: #{tpu_custom_call.1} parent=1 // pred_check
      _
    $region79: #{tpu_custom_call.1} parent=1 // pred_check_branch
      %172 = sbr.rel (0) target = $region81
    $region80: #{tpu_custom_call.1} parent=1 // pred_region
      %174 = dma.done [#allocation3], 512
    $region81: #{tpu_custom_call.1} parent=1 // pred_fallthru
      _
    // Predicated region
    $region82: #{tpu_custom_call.1} parent=1 // pred_check
      _
    $region83: #{tpu_custom_call.1} parent=1 // pred_check_branch
      %176 = sbr.rel (0) target = $region85
    $region84: #{tpu_custom_call.1} parent=1 // pred_region
      %178 = dma.done [#allocation6], 512
    $region85: #{tpu_custom_call.1} parent=1 // pred_fallthru
      _
    // Predicated region
    $region86: #{tpu_custom_call.1} parent=1 // pred_check
      _
    $region87: #{tpu_custom_call.1} parent=1 // pred_check_branch
      %180 = sbr.rel (0) target = $region89
    $region88: #{tpu_custom_call.1} parent=1 // pred_region
      %182 = dma.done [#allocation6], 16
    $region89: #{tpu_custom_call.1} parent=1 // pred_fallthru
      _
    // Predicated region
    $region90: #{tpu_custom_call.1} parent=1 // pred_check
      _
    $region91: #{tpu_custom_call.1} parent=1 // pred_check_branch
      %184 = sbr.rel (0) target = $region93
    $region92: #{tpu_custom_call.1} parent=1 // pred_region
      %186 = dma.done [#allocation9], 16
    $region93: #{tpu_custom_call.1} parent=1 // pred_fallthru
      _
    // Predicated region
    $region94: #{tpu_custom_call.1} parent=1 // pred_check
      _
    $region95: #{tpu_custom_call.1} parent=1 // pred_check_branch
      %188 = sbr.rel (0) target = $region97
    $region96: #{tpu_custom_call.1} parent=1 // pred_region
      %190 = dma.done [#allocation9], 16
    $region97: #{tpu_custom_call.1} parent=1 // pred_fallthru
      _
    // Predicated region
    $region98: #{tpu_custom_call.1} parent=1 // pred_check
      _
    $region99: #{tpu_custom_call.1} parent=1 // pred_check_branch
      %192 = sbr.rel (0) target = $region101
    $region100: #{tpu_custom_call.1} parent=1 // pred_region
      %194 = dma.done [#allocation12], 96
    $region101: #{tpu_custom_call.1} parent=1 // pred_fallthru
      _
    // Predicated region
    $region102: #{tpu_custom_call.1} parent=1 // pred_check
      _
    $region103: #{tpu_custom_call.1} parent=1 // pred_check_branch
      %196 = sbr.rel (0) target = $region105
    $region104: #{tpu_custom_call.1} parent=1 // pred_region
      %198 = dma.done [#allocation12], 4608
    $region105: #{tpu_custom_call.1} parent=1 // pred_fallthru
      _
    // Predicated region
    $region106: #{tpu_custom_call.1} parent=1 // pred_check
      _
    $region107: #{tpu_custom_call.1} parent=1 // pred_check_branch
      %200 = sbr.rel (0) target = $region109
    $region108: #{tpu_custom_call.1} parent=1 // pred_region
      %202 = dma.done [#allocation15], 96
    $region109: #{tpu_custom_call.1} parent=1 // pred_fallthru
      _
    // Predicated region
    $region110: #{tpu_custom_call.1} parent=1 // pred_check
      _
    $region111: #{tpu_custom_call.1} parent=1 // pred_check_branch
      %204 = sbr.rel (0) target = $region113
    $region112: #{tpu_custom_call.1} parent=1 // pred_region
      %206 = dma.done [#allocation15], 96
    $region113: #{tpu_custom_call.1} parent=1 // pred_fallthru
      _
    // Predicated region
    $region114: #{tpu_custom_call.1} parent=1 // pred_check
      _
    $region115: #{tpu_custom_call.1} parent=1 // pred_check_branch
      %208 = sbr.rel (0) target = $region117
    $region116: #{tpu_custom_call.1} parent=1 // pred_region
      %210 = dma.done [#allocation18], 32
    $region117: #{tpu_custom_call.1} parent=1 // pred_fallthru
      _
    %v212 = vld [vmem:[%s1] sm:$0xf]
    %v213 = vld [vmem:[%s1 + $0x4] sm:$0xf]
    %v214 = vld [vmem:[%s1 + $0x8] sm:$0xf]
    %v215 = vld [vmem:[%s1 + $0xc] sm:$0xf]
    %v216 = vld [vmem:[%s1 + $0x10] sm:$0xf]
    %v217 = vld [vmem:[%s1 + $0x14] sm:$0xf]
    %v218 = vld [vmem:[%s1 + $0x18] sm:$0xf]
    %v219 = vld [vmem:[%s1 + $0x1c] sm:$0xf]
    %v220 = vld [vmem:[#allocation2] sm:$0xf]
    %v221 = vld [vmem:[#allocation2 + $0x4] sm:$0xf]
    %v222 = vld [vmem:[#allocation2 + $0x8] sm:$0xf]
    %v223 = vld [vmem:[#allocation2 + $0xc] sm:$0xf]
    %v224 = vld [vmem:[#allocation2 + $0x10] sm:$0xf]
    %v225 = vld [vmem:[#allocation2 + $0x14] sm:$0xf]
    %v226 = vld [vmem:[#allocation2 + $0x18] sm:$0xf]
    %v227 = vld [vmem:[#allocation2 + $0x1c] sm:$0xf]
    %v228 = vld [vmem:[#allocation5] sm:$0xf]
    %v229 = vld [vmem:[#allocation5 + $0x4] sm:$0xf]
    %v230 = vld [vmem:[#allocation5 + $0x8] sm:$0xf]
    %v231 = vld [vmem:[#allocation5 + $0xc] sm:$0xf]
    %v232 = vld [vmem:[#allocation5 + $0x10] sm:$0xf]
    %v233 = vld [vmem:[#allocation5 + $0x14] sm:$0xf]
    %v234 = vld [vmem:[#allocation5 + $0x18] sm:$0xf]
    %v235 = vld [vmem:[#allocation5 + $0x1c] sm:$0xf]
    %v236 = vld [vmem:[%s0] sm:$0xff]
    %v237 = vld [vmem:[%s0 + $0x8] sm:$0xff]
    %v238 = vpack.c.bf16 %v237, %v236
    %v239 = vld [vmem:[%s7] sm:$0xf]
    %v240 = vld [vmem:[#allocation10] sm:$0x1]
    %v242 = vperm.slane %v240, 0
    %vm244 = vcmask 64512
    %v246 = vsel %vm244, %v238, 0
    %vm248 = vcmask 1043456
    %v250 = vsel %vm248, %v239, 0
    %252 = vmatpush.bf16.msra.mxu0 0
    %253 = vmatpush.bf16.msra.mxu0 0
    %254 = vmatpush.bf16.msra.mxu0 0
    %255 = vmatpush.bf16.msra.mxu0 0
    %256 = vmatpush.bf16.msra.mxu0 0
    %257 = vmatpush.bf16.msra.mxu0 0
    %258 = vmatpush.bf16.msra.mxu0 0
    %259 = vmatpush.bf16.msra.mxu0 %v250
    %260 = vmatmul.bf16.gmra.mxu0 %v246
    %v261 = vpop.f32.mrf.mxu0
    %v262 = vadd.f32 %v242, %v261
    %v263 = vpop.f32.mrf.mxu0
    %v264 = vadd.f32 %v242, %v263
    %265 = vdwg.mxu0
    %v266 = vpack.c.bf16 %v264, %v262
    %v267 = vpack.c.bf16 0.0, 0.0
    %v276 = vunpack.c.l.b16 %v228
    %v277 = vunpack.c.l.b16 %v229
    %v278 = vunpack.c.l.b16 %v230
    %v279 = vunpack.c.l.b16 %v231
    %v280 = vunpack.c.l.b16 %v232
    %v281 = vunpack.c.l.b16 %v233
    %v282 = vunpack.c.l.b16 %v234
    %v283 = vunpack.c.l.b16 %v235
    %v284 = vpack.c.b16 %v277, %v276
    %v285 = vpack.c.b16 %v279, %v278
    %v286 = vpack.c.b16 %v281, %v280
    %v287 = vpack.c.b16 %v283, %v282
    %vm288 = vcmask 523264
    %v290 = vsel %vm288, %v284, 0
    %v293 = vsel %vm288, %v285, 0
    %v296 = vsel %vm288, %v286, 0
    %v299 = vsel %vm288, %v287, 0
    %301 = vmatpush.bf16.msra.mxu0 0
    %302 = vmatpush.bf16.msra.mxu0 0
    %303 = vmatpush.bf16.msra.mxu0 0
    %304 = vmatpush.bf16.msra.mxu0 0
    %305 = vmatpush.bf16.msra.mxu0 %v267
    %306 = vmatpush.bf16.msra.mxu0 %v267
    %307 = vmatpush.bf16.msra.mxu0 %v267
    %308 = vmatpush.bf16.msra.mxu0 %v266
    %309 = vmatmul.bf16.gmra.mxu0 %v290
    %v310 = vpop.f32.mrf.mxu0
    %v311 = vadd.f32 %v262, %v310
    %v312 = vpop.f32.mrf.mxu0
    %v313 = vadd.f32 %v264, %v312
    %314 = vmatmul.bf16.gmra.mxu0 %v293
    %v315 = vpop.f32.mrf.mxu0
    %v316 = vadd.f32 0.0, %v315
    %v317 = vpop.f32.mrf.mxu0
    %v318 = vadd.f32 0.0, %v317
    %319 = vmatmul.bf16.gmra.mxu0 %v296
    %v320 = vpop.f32.mrf.mxu0
    %v321 = vadd.f32 0.0, %v320
    %v322 = vpop.f32.mrf.mxu0
    %v323 = vadd.f32 0.0, %v322
    %324 = vmatmul.bf16.gmra.mxu0 %v299
    %v325 = vpop.f32.mrf.mxu0
    %v326 = vadd.f32 0.0, %v325
    %v327 = vpop.f32.mrf.mxu0
    %v328 = vadd.f32 0.0, %v327
    %329 = vdwg.mxu0
    %v330 = vpack.c.bf16 %v313, %v311
    %v331 = vpack.c.bf16 %v318, %v316
    %v332 = vpack.c.bf16 %v323, %v321
    %v333 = vpack.c.bf16 %v328, %v326
    %334 = vmatpush.bf16.msra.mxu0 0
    %335 = vmatpush.bf16.msra.mxu0 0
    %336 = vmatpush.bf16.msra.mxu0 0
    %337 = vmatpush.bf16.msra.mxu0 0
    %338 = vmatpush.bf16.msra.mxu0 %v333
    %339 = vmatpush.bf16.msra.mxu0 %v332
    %340 = vmatpush.bf16.msra.mxu0 %v331
    %341 = vmatpush.bf16.msra.mxu0 %v330
    %342 = vmatmul.bf16.gmra.mxu0 %v290
    %v343 = vpop.f32.mrf.mxu0
    %v344 = vadd.f32 %v262, %v343
    %v345 = vpop.f32.mrf.mxu0
    %v346 = vadd.f32 %v264, %v345
    %347 = vmatmul.bf16.gmra.mxu0 %v293
    %v348 = vpop.f32.mrf.mxu0
    %v349 = vadd.f32 0.0, %v348
    %v350 = vpop.f32.mrf.mxu0
    %v351 = vadd.f32 0.0, %v350
    %352 = vmatmul.bf16.gmra.mxu0 %v296
    %v353 = vpop.f32.mrf.mxu0
    %v354 = vadd.f32 0.0, %v353
    %v355 = vpop.f32.mrf.mxu0
    %v356 = vadd.f32 0.0, %v355
    %357 = vmatmul.bf16.gmra.mxu0 %v299
    %v358 = vpop.f32.mrf.mxu0
    %v359 = vadd.f32 0.0, %v358
    %v360 = vpop.f32.mrf.mxu0
    %v361 = vadd.f32 0.0, %v360
    %362 = vdwg.mxu0
    %v363 = vpack.c.bf16 %v346, %v344
    %v364 = vpack.c.bf16 %v351, %v349
    %v365 = vpack.c.bf16 %v356, %v354
    %v366 = vpack.c.bf16 %v361, %v359
    %v375 = vunpack.c.l.b16 %v212
    %v376 = vunpack.c.l.b16 %v213
    %v377 = vunpack.c.l.b16 %v214
    %v378 = vunpack.c.l.b16 %v215
    %v379 = vunpack.c.l.b16 %v216
    %v380 = vunpack.c.l.b16 %v217
    %v381 = vunpack.c.l.b16 %v218
    %v382 = vunpack.c.l.b16 %v219
    %v383 = vpack.c.b16 %v376, %v375
    %v384 = vpack.c.b16 %v378, %v377
    %v385 = vpack.c.b16 %v380, %v379
    %v386 = vpack.c.b16 %v382, %v381
    %v388 = vsel %vm288, %v383, 0
    %v391 = vsel %vm288, %v384, 0
    %v394 = vsel %vm288, %v385, 0
    %v397 = vsel %vm288, %v386, 0
    %399 = vmatpush.bf16.msra.mxu0 0
    %400 = vmatpush.bf16.msra.mxu0 0
    %401 = vmatpush.bf16.msra.mxu0 0
    %402 = vmatpush.bf16.msra.mxu0 0
    %403 = vmatpush.bf16.msra.mxu0 %v366
    %404 = vmatpush.bf16.msra.mxu0 %v365
    %405 = vmatpush.bf16.msra.mxu0 %v364
    %406 = vmatpush.bf16.msra.mxu0 %v363
    %407 = vmatmul.bf16.gmra.mxu0 %v388
    %v408 = vpop.f32.mrf.mxu0
    %v409 = vadd.f32 %v344, %v408
    %v410 = vpop.f32.mrf.mxu0
    %v411 = vadd.f32 %v346, %v410
    %412 = vmatmul.bf16.gmra.mxu0 %v391
    %v413 = vpop.f32.mrf.mxu0
    %v414 = vadd.f32 %v349, %v413
    %v415 = vpop.f32.mrf.mxu0
    %v416 = vadd.f32 %v351, %v415
    %417 = vmatmul.bf16.gmra.mxu0 %v394
    %v418 = vpop.f32.mrf.mxu0
    %v419 = vadd.f32 %v354, %v418
    %v420 = vpop.f32.mrf.mxu0
    %v421 = vadd.f32 %v356, %v420
    %422 = vmatmul.bf16.gmra.mxu0 %v397
    %v423 = vpop.f32.mrf.mxu0
    %v424 = vadd.f32 %v359, %v423
    %v425 = vpop.f32.mrf.mxu0
    %v426 = vadd.f32 %v361, %v425
    %427 = vdwg.mxu0
    %v436 = vunpack.c.l.b16 %v220
    %v437 = vunpack.c.l.b16 %v221
    %v438 = vunpack.c.l.b16 %v222
    %v439 = vunpack.c.l.b16 %v223
    %v440 = vunpack.c.l.b16 %v224
    %v441 = vunpack.c.l.b16 %v225
    %v442 = vunpack.c.l.b16 %v226
    %v443 = vunpack.c.l.b16 %v227
    %v444 = vpack.c.b16 %v437, %v436
    %v445 = vpack.c.b16 %v439, %v438
    %v446 = vpack.c.b16 %v441, %v440
    %v447 = vpack.c.b16 %v443, %v442
    %v449 = vsel %vm288, %v444, 0
    %v452 = vsel %vm288, %v445, 0
    %v455 = vsel %vm288, %v446, 0
    %v458 = vsel %vm288, %v447, 0
    %460 = vmatpush.bf16.msra.mxu0 0
    %461 = vmatpush.bf16.msra.mxu0 0
    %462 = vmatpush.bf16.msra.mxu0 0
    %463 = vmatpush.bf16.msra.mxu0 0
    %464 = vmatpush.bf16.msra.mxu0 %v366
    %465 = vmatpush.bf16.msra.mxu0 %v365
    %466 = vmatpush.bf16.msra.mxu0 %v364
    %467 = vmatpush.bf16.msra.mxu0 %v363
    %468 = vmatmul.bf16.gmra.mxu0 %v449
    %v469 = vpop.f32.mrf.mxu0
    %v470 = vadd.f32 %v344, %v469
    %v471 = vpop.f32.mrf.mxu0
    %v472 = vadd.f32 %v346, %v471
    %473 = vmatmul.bf16.gmra.mxu0 %v452
    %v474 = vpop.f32.mrf.mxu0
    %v475 = vadd.f32 %v349, %v474
    %v476 = vpop.f32.mrf.mxu0
    %v477 = vadd.f32 %v351, %v476
    %478 = vmatmul.bf16.gmra.mxu0 %v455
    %v479 = vpop.f32.mrf.mxu0
    %v480 = vadd.f32 %v354, %v479
    %v481 = vpop.f32.mrf.mxu0
    %v482 = vadd.f32 %v356, %v481
    %483 = vmatmul.bf16.gmra.mxu0 %v458
    %v484 = vpop.f32.mrf.mxu0
    %v485 = vadd.f32 %v359, %v484
    %v486 = vpop.f32.mrf.mxu0
    %v487 = vadd.f32 %v361, %v486
    %488 = vdwg.mxu0
    %489 = vmatpush.bf16.msra.mxu0 0
    %490 = vmatpush.bf16.msra.mxu0 0
    %491 = vmatpush.bf16.msra.mxu0 0
    %492 = vmatpush.bf16.msra.mxu0 0
    %493 = vmatpush.bf16.msra.mxu0 %v366
    %494 = vmatpush.bf16.msra.mxu0 %v365
    %495 = vmatpush.bf16.msra.mxu0 %v364
    %496 = vmatpush.bf16.msra.mxu0 %v363
    %497 = vmatmul.bf16.gmra.mxu0 %v290
    %v498 = vpop.f32.mrf.mxu0
    %v499 = vadd.f32 %v344, %v498
    %v500 = vpop.f32.mrf.mxu0
    %v501 = vadd.f32 %v346, %v500
    %502 = vmatmul.bf16.gmra.mxu0 %v293
    %v503 = vpop.f32.mrf.mxu0
    %v504 = vadd.f32 %v349, %v503
    %v505 = vpop.f32.mrf.mxu0
    %v506 = vadd.f32 %v351, %v505
    %507 = vmatmul.bf16.gmra.mxu0 %v296
    %v508 = vpop.f32.mrf.mxu0
    %v509 = vadd.f32 %v354, %v508
    %v510 = vpop.f32.mrf.mxu0
    %v511 = vadd.f32 %v356, %v510
    %512 = vmatmul.bf16.gmra.mxu0 %v299
    %v513 = vpop.f32.mrf.mxu0
    %v514 = vadd.f32 %v359, %v513
    %v515 = vpop.f32.mrf.mxu0
    %v516 = vadd.f32 %v361, %v515
    %517 = vdwg.mxu0
    %526 = vrot.lane.b32.xlu0 %v470, 32
    %v527 = vpop.permute.xlu0 %526
    %528 = vrot.lane.b32.xlu0 %v472, 32
    %v529 = vpop.permute.xlu0 %528
    %530 = vrot.lane.b32.xlu0 %v475, 32
    %v531 = vpop.permute.xlu0 %530
    %532 = vrot.lane.b32.xlu0 %v477, 32
    %v533 = vpop.permute.xlu0 %532
    %534 = vrot.lane.b32.xlu0 %v480, 32
    %v535 = vpop.permute.xlu0 %534
    %536 = vrot.lane.b32.xlu0 %v482, 32
    %v537 = vpop.permute.xlu0 %536
    %538 = vrot.lane.b32.xlu0 %v485, 32
    %v539 = vpop.permute.xlu0 %538
    %540 = vrot.lane.b32.xlu0 %v487, 32
    %v541 = vpop.permute.xlu0 %540
    %558 = vrot.lane.b32.xlu0 %v499, 64
    %v559 = vpop.permute.xlu0 %558
    %560 = vrot.lane.b32.xlu0 %v501, 64
    %v561 = vpop.permute.xlu0 %560
    %562 = vrot.lane.b32.xlu0 %v504, 64
    %v563 = vpop.permute.xlu0 %562
    %564 = vrot.lane.b32.xlu0 %v506, 64
    %v565 = vpop.permute.xlu0 %564
    %566 = vrot.lane.b32.xlu0 %v509, 64
    %v567 = vpop.permute.xlu0 %566
    %568 = vrot.lane.b32.xlu0 %v511, 64
    %v569 = vpop.permute.xlu0 %568
    %570 = vrot.lane.b32.xlu0 %v514, 64
    %v571 = vpop.permute.xlu0 %570
    %572 = vrot.lane.b32.xlu0 %v516, 64
    %v573 = vpop.permute.xlu0 %572
    %vm582 = vcmask 261120
    %v583 = vsel %vm582, %v409, %v527
    %v584 = vsel %vm582, %v411, %v529
    %v585 = vsel %vm582, %v414, %v531
    %v586 = vsel %vm582, %v416, %v533
    %v587 = vsel %vm582, %v419, %v535
    %v588 = vsel %vm582, %v421, %v537
    %v589 = vsel %vm582, %v424, %v539
    %v590 = vsel %vm582, %v426, %v541
    %v591 = vsel %vm288, %v583, %v559
    %v592 = vsel %vm288, %v584, %v561
    %v593 = vsel %vm288, %v585, %v563
    %v594 = vsel %vm288, %v586, %v565
    %v595 = vsel %vm288, %v587, %v567
    %v596 = vsel %vm288, %v588, %v569
    %v597 = vsel %vm288, %v589, %v571
    %v598 = vsel %vm288, %v590, %v573
    %v599 = vpack.c.bf16 %v591, %v591
    %v600 = vpack.c.bf16 %v592, %v592
    %v601 = vpack.c.bf16 %v593, %v593
    %v602 = vpack.c.bf16 %v594, %v594
    %v603 = vpack.c.bf16 %v595, %v595
    %v604 = vpack.c.bf16 %v596, %v596
    %v605 = vpack.c.bf16 %v597, %v597
    %v606 = vpack.c.bf16 %v598, %v598
    %v607 = vld [vmem:[%s9] sm:$0xf]
    %v608 = vld [vmem:[%s9 + $0x4] sm:$0xf]
    %v609 = vld [vmem:[%s9 + $0x8] sm:$0xf]
    %v610 = vld [vmem:[%s9 + $0xc] sm:$0xf]
    %v611 = vld [vmem:[%s9 + $0x10] sm:$0xf]
    %v612 = vld [vmem:[%s9 + $0x14] sm:$0xf]
    %v613 = vld [vmem:[%s9 + $0x18] sm:$0xf]
    %v614 = vld [vmem:[%s9 + $0x1c] sm:$0xf]
    %v615 = vld [vmem:[%s9 + $0x20] sm:$0xf]
    %v616 = vld [vmem:[%s9 + $0x24] sm:$0xf]
    %v617 = vld [vmem:[%s9 + $0x28] sm:$0xf]
    %v618 = vld [vmem:[%s9 + $0x2c] sm:$0xf]
    %v619 = vld [vmem:[#allocation11] sm:$0x1]
    %v621 = vperm.slane %v619, 0
    %v625 = vunpack.c.l.b16 %v599
    %v626 = vunpack.c.l.b16 %v600
    %v627 = vpack.c.b16 %v626, %v625
    %v640 = vunpack.c.l.b16 %v607
    %v641 = vunpack.c.l.b16 %v608
    %v642 = vunpack.c.l.b16 %v609
    %v643 = vunpack.c.l.b16 %v610
    %v644 = vunpack.c.l.b16 %v611
    %v645 = vunpack.c.l.b16 %v612
    %v646 = vunpack.c.l.b16 %v613
    %v647 = vunpack.c.l.b16 %v614
    %v648 = vunpack.c.l.b16 %v615
    %v649 = vunpack.c.l.b16 %v616
    %v650 = vunpack.c.l.b16 %v617
    %v651 = vunpack.c.l.b16 %v618
    %v652 = vpack.c.b16 %v641, %v640
    %v653 = vpack.c.b16 %v643, %v642
    %v654 = vpack.c.b16 %v645, %v644
    %v655 = vpack.c.b16 %v647, %v646
    %v656 = vpack.c.b16 %v649, %v648
    %v657 = vpack.c.b16 %v651, %v650
    %vm664 = vcmask 785408
    %v666 = vsel %vm664, %v627, 0
    %668 = vmatpush.bf16.msra.mxu0 0
    %669 = vmatpush.bf16.msra.mxu0 0
    %670 = vmatpush.bf16.msra.mxu0 %v657
    %671 = vmatpush.bf16.msra.mxu0 %v656
    %672 = vmatpush.bf16.msra.mxu0 %v655
    %673 = vmatpush.bf16.msra.mxu0 %v654
    %674 = vmatpush.bf16.msra.mxu0 %v653
    %675 = vmatpush.bf16.msra.mxu0 %v652
    %676 = vmatmul.bf16.gmra.mxu0 %v666
    %v677 = vpop.f32.mrf.mxu0
    %v678 = vadd.f32 %v621, %v677
    %v679 = vpop.f32.mrf.mxu0
    %v680 = vadd.f32 %v621, %v679
    %681 = vdwg.mxu0
    %v682 = vmax.f32 %v678, 0.0
    %v683 = vmax.f32 %v680, 0.0
    %v684 = vpack.c.bf16 %v683, %v682
    %v685 = vld [vmem:[#allocation13] sm:$0xf]
    %v686 = vld [vmem:[#allocation13 + $0x4] sm:$0xf]
    %v687 = vld [vmem:[#allocation13 + $0x8] sm:$0xf]
    %v688 = vld [vmem:[#allocation13 + $0xc] sm:$0xf]
    %v689 = vld [vmem:[#allocation13 + $0x10] sm:$0xf]
    %v690 = vld [vmem:[#allocation13 + $0x14] sm:$0xf]
    %v691 = vld [vmem:[#allocation13 + $0x18] sm:$0xf]
    %v692 = vld [vmem:[#allocation13 + $0x1c] sm:$0xf]
    %v693 = vld [vmem:[#allocation13 + $0x20] sm:$0xf]
    %v694 = vld [vmem:[#allocation13 + $0x24] sm:$0xf]
    %v695 = vld [vmem:[#allocation13 + $0x28] sm:$0xf]
    %v696 = vld [vmem:[#allocation13 + $0x2c] sm:$0xf]
    %v697 = vld [vmem:[#allocation14] sm:$0x1]
    %v699 = vperm.slane %v697, 0
    %v713 = vunpack.c.l.b16 %v685
    %v714 = vunpack.c.l.b16 %v686
    %v715 = vunpack.c.l.b16 %v687
    %v716 = vunpack.c.l.b16 %v688
    %v717 = vunpack.c.l.b16 %v689
    %v718 = vunpack.c.l.b16 %v690
    %v719 = vunpack.c.l.b16 %v691
    %v720 = vunpack.c.l.b16 %v692
    %v721 = vunpack.c.l.b16 %v693
    %v722 = vunpack.c.l.b16 %v694
    %v723 = vunpack.c.l.b16 %v695
    %v724 = vunpack.c.l.b16 %v696
    %v725 = vpack.c.b16 %v714, %v713
    %v726 = vpack.c.b16 %v716, %v715
    %v727 = vpack.c.b16 %v718, %v717
    %v728 = vpack.c.b16 %v720, %v719
    %v729 = vpack.c.b16 %v722, %v721
    %v730 = vpack.c.b16 %v724, %v723
    %v738 = vsel %vm664, %v684, 0
    %740 = vmatpush.bf16.msra.mxu0 0
    %741 = vmatpush.bf16.msra.mxu0 0
    %742 = vmatpush.bf16.msra.mxu0 %v730
    %743 = vmatpush.bf16.msra.mxu0 %v729
    %744 = vmatpush.bf16.msra.mxu0 %v728
    %745 = vmatpush.bf16.msra.mxu0 %v727
    %746 = vmatpush.bf16.msra.mxu0 %v726
    %747 = vmatpush.bf16.msra.mxu0 %v725
    %748 = vmatmul.bf16.gmra.mxu0 %v738
    %v749 = vpop.f32.mrf.mxu0
    %v750 = vadd.f32 %v699, %v749
    %v751 = vpop.f32.mrf.mxu0
    %v752 = vadd.f32 %v699, %v751
    %753 = vdwg.mxu0
    %v754 = vmax.f32 %v750, 0.0
    %v755 = vmax.f32 %v752, 0.0
    %v756 = vpack.c.bf16 %v755, %v754
    %v757 = vld [vmem:[%s13] sm:$0xf]
    %v758 = vld [vmem:[%s13 + $0x4] sm:$0xf]
    %v759 = vld [vmem:[%s13 + $0x8] sm:$0xf]
    %v760 = vld [vmem:[%s13 + $0xc] sm:$0xf]
    %v761 = vld [vmem:[%s13 + $0x10] sm:$0xf]
    %v762 = vld [vmem:[%s13 + $0x14] sm:$0xf]
    %v763 = vld [vmem:[%s13 + $0x18] sm:$0xf]
    %v764 = vld [vmem:[%s13 + $0x1c] sm:$0xf]
    %v765 = vld [vmem:[%s13 + $0x20] sm:$0xf]
    %v766 = vld [vmem:[%s13 + $0x24] sm:$0xf]
    %v767 = vld [vmem:[%s13 + $0x28] sm:$0xf]
    %v768 = vld [vmem:[%s13 + $0x2c] sm:$0xf]
    %v769 = vld [vmem:[#allocation16] sm:$0x1]
    %v771 = vperm.slane %v769, 0
    %v785 = vunpack.c.l.b16 %v757
    %v786 = vunpack.c.l.b16 %v758
    %v787 = vunpack.c.l.b16 %v759
    %v788 = vunpack.c.l.b16 %v760
    %v789 = vunpack.c.l.b16 %v761
    %v790 = vunpack.c.l.b16 %v762
    %v791 = vunpack.c.l.b16 %v763
    %v792 = vunpack.c.l.b16 %v764
    %v793 = vunpack.c.l.b16 %v765
    %v794 = vunpack.c.l.b16 %v766
    %v795 = vunpack.c.l.b16 %v767
    %v796 = vunpack.c.l.b16 %v768
    %v797 = vpack.c.b16 %v786, %v785
    %v798 = vpack.c.b16 %v788, %v787
    %v799 = vpack.c.b16 %v790, %v789
    %v800 = vpack.c.b16 %v792, %v791
    %v801 = vpack.c.b16 %v794, %v793
    %v802 = vpack.c.b16 %v796, %v795
    %v810 = vsel %vm664, %v756, 0
    %812 = vmatpush.bf16.msra.mxu0 0
    %813 = vmatpush.bf16.msra.mxu0 0
    %814 = vmatpush.bf16.msra.mxu0 %v802
    %815 = vmatpush.bf16.msra.mxu0 %v801
    %816 = vmatpush.bf16.msra.mxu0 %v800
    %817 = vmatpush.bf16.msra.mxu0 %v799
    %818 = vmatpush.bf16.msra.mxu0 %v798
    %819 = vmatpush.bf16.msra.mxu0 %v797
    %820 = vmatmul.bf16.gmra.mxu0 %v810
    %v821 = vpop.f32.mrf.mxu0
    %v822 = vadd.f32 %v771, %v821
    %v823 = vpop.f32.mrf.mxu0
    %v824 = vadd.f32 %v771, %v823
    %825 = vdwg.mxu0
    %v826 = vmax.f32 %v822, 0.0
    %v827 = vmax.f32 %v824, 0.0
    %s828 = scalar_lea.vmem %s9, 48
    %v829 = vld [vmem:[%s828] sm:$0xf]
    %v830 = vld [vmem:[%s828 + $0x4] sm:$0xf]
    %v831 = vld [vmem:[%s828 + $0x8] sm:$0xf]
    %v832 = vld [vmem:[%s828 + $0xc] sm:$0xf]
    %v833 = vld [vmem:[%s828 + $0x10] sm:$0xf]
    %v834 = vld [vmem:[%s828 + $0x14] sm:$0xf]
    %v835 = vld [vmem:[%s828 + $0x18] sm:$0xf]
    %v836 = vld [vmem:[%s828 + $0x1c] sm:$0xf]
    %v837 = vld [vmem:[%s828 + $0x20] sm:$0xf]
    %v838 = vld [vmem:[%s828 + $0x24] sm:$0xf]
    %v839 = vld [vmem:[%s828 + $0x28] sm:$0xf]
    %v840 = vld [vmem:[%s828 + $0x2c] sm:$0xf]
    %s841 = scalar_lea.vmem [#allocation11], 1
    %v842 = vld [vmem:[%s841] sm:$0x1]
    %v844 = vperm.slane %v842, 0
    %v850 = vunpack.c.l.b16 %v601
    %v851 = vunpack.c.l.b16 %v602
    %v852 = vunpack.c.l.b16 %v603
    %v853 = vunpack.c.l.b16 %v604
    %v854 = vpack.c.b16 %v851, %v850
    %v855 = vpack.c.b16 %v853, %v852
    %v868 = vunpack.c.l.b16 %v829
    %v869 = vunpack.c.l.b16 %v830
    %v870 = vunpack.c.l.b16 %v831
    %v871 = vunpack.c.l.b16 %v832
    %v872 = vunpack.c.l.b16 %v833
    %v873 = vunpack.c.l.b16 %v834
    %v874 = vunpack.c.l.b16 %v835
    %v875 = vunpack.c.l.b16 %v836
    %v876 = vunpack.c.l.b16 %v837
    %v877 = vunpack.c.l.b16 %v838
    %v878 = vunpack.c.l.b16 %v839
    %v879 = vunpack.c.l.b16 %v840
    %v880 = vpack.c.b16 %v869, %v868
    %v881 = vpack.c.b16 %v871, %v870
    %v882 = vpack.c.b16 %v873, %v872
    %v883 = vpack.c.b16 %v875, %v874
    %v884 = vpack.c.b16 %v877, %v876
    %v885 = vpack.c.b16 %v879, %v878
    %v893 = vsel %vm664, %v854, 0
    %v896 = vsel %vm664, %v855, 0
    %898 = vmatpush.bf16.msra.mxu0 0
    %899 = vmatpush.bf16.msra.mxu0 0
    %900 = vmatpush.bf16.msra.mxu0 %v885
    %901 = vmatpush.bf16.msra.mxu0 %v884
    %902 = vmatpush.bf16.msra.mxu0 %v883
    %903 = vmatpush.bf16.msra.mxu0 %v882
    %904 = vmatpush.bf16.msra.mxu0 %v881
    %905 = vmatpush.bf16.msra.mxu0 %v880
    %906 = vmatmul.bf16.gmra.mxu0 %v893
    %v907 = vpop.f32.mrf.mxu0
    %v908 = vadd.f32 %v844, %v907
    %v909 = vpop.f32.mrf.mxu0
    %v910 = vadd.f32 %v844, %v909
    %911 = vmatmul.bf16.gmra.mxu0 %v896
    %v912 = vpop.f32.mrf.mxu0
    %v913 = vadd.f32 %v844, %v912
    %v914 = vpop.f32.mrf.mxu0
    %v915 = vadd.f32 %v844, %v914
    %916 = vdwg.mxu0
    %v917 = vmax.f32 %v908, 0.0
    %v918 = vmax.f32 %v910, 0.0
    %v919 = vmax.f32 %v913, 0.0
    %v920 = vmax.f32 %v915, 0.0
    %v921 = vpack.c.bf16 %v918, %v917
    %v922 = vpack.c.bf16 %v920, %v919
    %s923 = scalar_lea.vmem [#allocation13], 48
    %v924 = vld [vmem:[%s923] sm:$0xf]
    %v925 = vld [vmem:[%s923 + $0x4] sm:$0xf]
    %v926 = vld [vmem:[%s923 + $0x8] sm:$0xf]
    %v927 = vld [vmem:[%s923 + $0xc] sm:$0xf]
    %v928 = vld [vmem:[%s923 + $0x10] sm:$0xf]
    %v929 = vld [vmem:[%s923 + $0x14] sm:$0xf]
    %v930 = vld [vmem:[%s923 + $0x18] sm:$0xf]
    %v931 = vld [vmem:[%s923 + $0x1c] sm:$0xf]
    %v932 = vld [vmem:[%s923 + $0x20] sm:$0xf]
    %v933 = vld [vmem:[%s923 + $0x24] sm:$0xf]
    %v934 = vld [vmem:[%s923 + $0x28] sm:$0xf]
    %v935 = vld [vmem:[%s923 + $0x2c] sm:$0xf]
    %s936 = scalar_lea.vmem [#allocation14], 1
    %v937 = vld [vmem:[%s936] sm:$0x1]
    %v939 = vperm.slane %v937, 0
    %v953 = vunpack.c.l.b16 %v924
    %v954 = vunpack.c.l.b16 %v925
    %v955 = vunpack.c.l.b16 %v926
    %v956 = vunpack.c.l.b16 %v927
    %v957 = vunpack.c.l.b16 %v928
    %v958 = vunpack.c.l.b16 %v929
    %v959 = vunpack.c.l.b16 %v930
    %v960 = vunpack.c.l.b16 %v931
    %v961 = vunpack.c.l.b16 %v932
    %v962 = vunpack.c.l.b16 %v933
    %v963 = vunpack.c.l.b16 %v934
    %v964 = vunpack.c.l.b16 %v935
    %v965 = vpack.c.b16 %v954, %v953
    %v966 = vpack.c.b16 %v956, %v955
    %v967 = vpack.c.b16 %v958, %v957
    %v968 = vpack.c.b16 %v960, %v959
    %v969 = vpack.c.b16 %v962, %v961
    %v970 = vpack.c.b16 %v964, %v963
    %v978 = vsel %vm664, %v921, 0
    %v981 = vsel %vm664, %v922, 0
    %983 = vmatpush.bf16.msra.mxu0 0
    %984 = vmatpush.bf16.msra.mxu0 0
    %985 = vmatpush.bf16.msra.mxu0 %v970
    %986 = vmatpush.bf16.msra.mxu0 %v969
    %987 = vmatpush.bf16.msra.mxu0 %v968
    %988 = vmatpush.bf16.msra.mxu0 %v967
    %989 = vmatpush.bf16.msra.mxu0 %v966
    %990 = vmatpush.bf16.msra.mxu0 %v965
    %991 = vmatmul.bf16.gmra.mxu0 %v978
    %v992 = vpop.f32.mrf.mxu0
    %v993 = vadd.f32 %v939, %v992
    %v994 = vpop.f32.mrf.mxu0
    %v995 = vadd.f32 %v939, %v994
    %996 = vmatmul.bf16.gmra.mxu0 %v981
    %v997 = vpop.f32.mrf.mxu0
    %v998 = vadd.f32 %v939, %v997
    %v999 = vpop.f32.mrf.mxu0
    %v1000 = vadd.f32 %v939, %v999
    %1001 = vdwg.mxu0
    %v1002 = vmax.f32 %v993, 0.0
    %v1003 = vmax.f32 %v995, 0.0
    %v1004 = vmax.f32 %v998, 0.0
    %v1005 = vmax.f32 %v1000, 0.0
    %v1006 = vpack.c.bf16 %v1003, %v1002
    %v1007 = vpack.c.bf16 %v1005, %v1004
    %s1008 = scalar_lea.vmem %s13, 48
    %v1009 = vld [vmem:[%s1008] sm:$0xf]
    %v1010 = vld [vmem:[%s1008 + $0x4] sm:$0xf]
    %v1011 = vld [vmem:[%s1008 + $0x8] sm:$0xf]
    %v1012 = vld [vmem:[%s1008 + $0xc] sm:$0xf]
    %v1013 = vld [vmem:[%s1008 + $0x10] sm:$0xf]
    %v1014 = vld [vmem:[%s1008 + $0x14] sm:$0xf]
    %v1015 = vld [vmem:[%s1008 + $0x18] sm:$0xf]
    %v1016 = vld [vmem:[%s1008 + $0x1c] sm:$0xf]
    %v1017 = vld [vmem:[%s1008 + $0x20] sm:$0xf]
    %v1018 = vld [vmem:[%s1008 + $0x24] sm:$0xf]
    %v1019 = vld [vmem:[%s1008 + $0x28] sm:$0xf]
    %v1020 = vld [vmem:[%s1008 + $0x2c] sm:$0xf]
    %s1021 = scalar_lea.vmem [#allocation16], 1
    %v1022 = vld [vmem:[%s1021] sm:$0x1]
    %v1024 = vperm.slane %v1022, 0
    %v1038 = vunpack.c.l.b16 %v1009
    %v1039 = vunpack.c.l.b16 %v1010
    %v1040 = vunpack.c.l.b16 %v1011
    %v1041 = vunpack.c.l.b16 %v1012
    %v1042 = vunpack.c.l.b16 %v1013
    %v1043 = vunpack.c.l.b16 %v1014
    %v1044 = vunpack.c.l.b16 %v1015
    %v1045 = vunpack.c.l.b16 %v1016
    %v1046 = vunpack.c.l.b16 %v1017
    %v1047 = vunpack.c.l.b16 %v1018
    %v1048 = vunpack.c.l.b16 %v1019
    %v1049 = vunpack.c.l.b16 %v1020
    %v1050 = vpack.c.b16 %v1039, %v1038
    %v1051 = vpack.c.b16 %v1041, %v1040
    %v1052 = vpack.c.b16 %v1043, %v1042
    %v1053 = vpack.c.b16 %v1045, %v1044
    %v1054 = vpack.c.b16 %v1047, %v1046
    %v1055 = vpack.c.b16 %v1049, %v1048
    %v1063 = vsel %vm664, %v1006, 0
    %v1066 = vsel %vm664, %v1007, 0
    %1068 = vmatpush.bf16.msra.mxu0 0
    %1069 = vmatpush.bf16.msra.mxu0 0
    %1070 = vmatpush.bf16.msra.mxu0 %v1055
    %1071 = vmatpush.bf16.msra.mxu0 %v1054
    %1072 = vmatpush.bf16.msra.mxu0 %v1053
    %1073 = vmatpush.bf16.msra.mxu0 %v1052
    %1074 = vmatpush.bf16.msra.mxu0 %v1051
    %1075 = vmatpush.bf16.msra.mxu0 %v1050
    %1076 = vmatmul.bf16.gmra.mxu0 %v1063
    %v1077 = vpop.f32.mrf.mxu0
    %v1078 = vadd.f32 %v1024, %v1077
    %v1079 = vpop.f32.mrf.mxu0
    %v1080 = vadd.f32 %v1024, %v1079
    %1081 = vmatmul.bf16.gmra.mxu0 %v1066
    %v1082 = vpop.f32.mrf.mxu0
    %v1083 = vadd.f32 %v1024, %v1082
    %v1084 = vpop.f32.mrf.mxu0
    %v1085 = vadd.f32 %v1024, %v1084
    %1086 = vdwg.mxu0
    %v1087 = vmax.f32 %v1078, 0.0
    %v1088 = vmax.f32 %v1080, 0.0
    %v1089 = vmax.f32 %v1083, 0.0
    %v1090 = vmax.f32 %v1085, 0.0
    %s1091 = scalar_lea.vmem %s9, 96
    %v1092 = vld [vmem:[%s1091] sm:$0xf]
    %v1093 = vld [vmem:[%s1091 + $0x4] sm:$0xf]
    %v1094 = vld [vmem:[%s1091 + $0x8] sm:$0xf]
    %v1095 = vld [vmem:[%s1091 + $0xc] sm:$0xf]
    %v1096 = vld [vmem:[%s1091 + $0x10] sm:$0xf]
    %v1097 = vld [vmem:[%s1091 + $0x14] sm:$0xf]
    %v1098 = vld [vmem:[%s1091 + $0x18] sm:$0xf]
    %v1099 = vld [vmem:[%s1091 + $0x1c] sm:$0xf]
    %v1100 = vld [vmem:[%s1091 + $0x20] sm:$0xf]
    %v1101 = vld [vmem:[%s1091 + $0x24] sm:$0xf]
    %v1102 = vld [vmem:[%s1091 + $0x28] sm:$0xf]
    %v1103 = vld [vmem:[%s1091 + $0x2c] sm:$0xf]
    %s1104 = scalar_lea.vmem [#allocation11], 2
    %v1105 = vld [vmem:[%s1104] sm:$0x1]
    %v1107 = vperm.slane %v1105, 0
    %v1111 = vunpack.c.l.b16 %v605
    %v1112 = vunpack.c.l.b16 %v606
    %v1113 = vpack.c.b16 %v1112, %v1111
    %v1126 = vunpack.c.l.b16 %v1092
    %v1127 = vunpack.c.l.b16 %v1093
    %v1128 = vunpack.c.l.b16 %v1094
    %v1129 = vunpack.c.l.b16 %v1095
    %v1130 = vunpack.c.l.b16 %v1096
    %v1131 = vunpack.c.l.b16 %v1097
    %v1132 = vunpack.c.l.b16 %v1098
    %v1133 = vunpack.c.l.b16 %v1099
    %v1134 = vunpack.c.l.b16 %v1100
    %v1135 = vunpack.c.l.b16 %v1101
    %v1136 = vunpack.c.l.b16 %v1102
    %v1137 = vunpack.c.l.b16 %v1103
    %v1138 = vpack.c.b16 %v1127, %v1126
    %v1139 = vpack.c.b16 %v1129, %v1128
    %v1140 = vpack.c.b16 %v1131, %v1130
    %v1141 = vpack.c.b16 %v1133, %v1132
    %v1142 = vpack.c.b16 %v1135, %v1134
    %v1143 = vpack.c.b16 %v1137, %v1136
    %v1151 = vsel %vm664, %v1113, 0
    %1153 = vmatpush.bf16.msra.mxu0 0
    %1154 = vmatpush.bf16.msra.mxu0 0
    %1155 = vmatpush.bf16.msra.mxu0 %v1143
    %1156 = vmatpush.bf16.msra.mxu0 %v1142
    %1157 = vmatpush.bf16.msra.mxu0 %v1141
    %1158 = vmatpush.bf16.msra.mxu0 %v1140
    %1159 = vmatpush.bf16.msra.mxu0 %v1139
    %1160 = vmatpush.bf16.msra.mxu0 %v1138
    %1161 = vmatmul.bf16.gmra.mxu0 %v1151
    %v1162 = vpop.f32.mrf.mxu0
    %v1163 = vadd.f32 %v1107, %v1162
    %v1164 = vpop.f32.mrf.mxu0
    %v1165 = vadd.f32 %v1107, %v1164
    %1166 = vdwg.mxu0
    %v1167 = vmax.f32 %v1163, 0.0
    %v1168 = vmax.f32 %v1165, 0.0
    %v1169 = vpack.c.bf16 %v1168, %v1167
    %s1170 = scalar_lea.vmem [#allocation13], 96
    %v1171 = vld [vmem:[%s1170] sm:$0xf]
    %v1172 = vld [vmem:[%s1170 + $0x4] sm:$0xf]
    %v1173 = vld [vmem:[%s1170 + $0x8] sm:$0xf]
    %v1174 = vld [vmem:[%s1170 + $0xc] sm:$0xf]
    %v1175 = vld [vmem:[%s1170 + $0x10] sm:$0xf]
    %v1176 = vld [vmem:[%s1170 + $0x14] sm:$0xf]
    %v1177 = vld [vmem:[%s1170 + $0x18] sm:$0xf]
    %v1178 = vld [vmem:[%s1170 + $0x1c] sm:$0xf]
    %v1179 = vld [vmem:[%s1170 + $0x20] sm:$0xf]
    %v1180 = vld [vmem:[%s1170 + $0x24] sm:$0xf]
    %v1181 = vld [vmem:[%s1170 + $0x28] sm:$0xf]
    %v1182 = vld [vmem:[%s1170 + $0x2c] sm:$0xf]
    %s1183 = scalar_lea.vmem [#allocation14], 2
    %v1184 = vld [vmem:[%s1183] sm:$0x1]
    %v1186 = vperm.slane %v1184, 0
    %v1200 = vunpack.c.l.b16 %v1171
    %v1201 = vunpack.c.l.b16 %v1172
    %v1202 = vunpack.c.l.b16 %v1173
    %v1203 = vunpack.c.l.b16 %v1174
    %v1204 = vunpack.c.l.b16 %v1175
    %v1205 = vunpack.c.l.b16 %v1176
    %v1206 = vunpack.c.l.b16 %v1177
    %v1207 = vunpack.c.l.b16 %v1178
    %v1208 = vunpack.c.l.b16 %v1179
    %v1209 = vunpack.c.l.b16 %v1180
    %v1210 = vunpack.c.l.b16 %v1181
    %v1211 = vunpack.c.l.b16 %v1182
    %v1212 = vpack.c.b16 %v1201, %v1200
    %v1213 = vpack.c.b16 %v1203, %v1202
    %v1214 = vpack.c.b16 %v1205, %v1204
    %v1215 = vpack.c.b16 %v1207, %v1206
    %v1216 = vpack.c.b16 %v1209, %v1208
    %v1217 = vpack.c.b16 %v1211, %v1210
    %v1225 = vsel %vm664, %v1169, 0
    %1227 = vmatpush.bf16.msra.mxu0 0
    %1228 = vmatpush.bf16.msra.mxu0 0
    %1229 = vmatpush.bf16.msra.mxu0 %v1217
    %1230 = vmatpush.bf16.msra.mxu0 %v1216
    %1231 = vmatpush.bf16.msra.mxu0 %v1215
    %1232 = vmatpush.bf16.msra.mxu0 %v1214
    %1233 = vmatpush.bf16.msra.mxu0 %v1213
    %1234 = vmatpush.bf16.msra.mxu0 %v1212
    %1235 = vmatmul.bf16.gmra.mxu0 %v1225
    %v1236 = vpop.f32.mrf.mxu0
    %v1237 = vadd.f32 %v1186, %v1236
    %v1238 = vpop.f32.mrf.mxu0
    %v1239 = vadd.f32 %v1186, %v1238
    %1240 = vdwg.mxu0
    %v1241 = vmax.f32 %v1237, 0.0
    %v1242 = vmax.f32 %v1239, 0.0
    %v1243 = vpack.c.bf16 %v1242, %v1241
    %s1244 = scalar_lea.vmem %s13, 96
    %v1245 = vld [vmem:[%s1244] sm:$0xf]
    %v1246 = vld [vmem:[%s1244 + $0x4] sm:$0xf]
    %v1247 = vld [vmem:[%s1244 + $0x8] sm:$0xf]
    %v1248 = vld [vmem:[%s1244 + $0xc] sm:$0xf]
    %v1249 = vld [vmem:[%s1244 + $0x10] sm:$0xf]
    %v1250 = vld [vmem:[%s1244 + $0x14] sm:$0xf]
    %v1251 = vld [vmem:[%s1244 + $0x18] sm:$0xf]
    %v1252 = vld [vmem:[%s1244 + $0x1c] sm:$0xf]
    %v1253 = vld [vmem:[%s1244 + $0x20] sm:$0xf]
    %v1254 = vld [vmem:[%s1244 + $0x24] sm:$0xf]
    %v1255 = vld [vmem:[%s1244 + $0x28] sm:$0xf]
    %v1256 = vld [vmem:[%s1244 + $0x2c] sm:$0xf]
    %s1257 = scalar_lea.vmem [#allocation16], 2
    %v1258 = vld [vmem:[%s1257] sm:$0x1]
    %v1260 = vperm.slane %v1258, 0
    %v1274 = vunpack.c.l.b16 %v1245
    %v1275 = vunpack.c.l.b16 %v1246
    %v1276 = vunpack.c.l.b16 %v1247
    %v1277 = vunpack.c.l.b16 %v1248
    %v1278 = vunpack.c.l.b16 %v1249
    %v1279 = vunpack.c.l.b16 %v1250
    %v1280 = vunpack.c.l.b16 %v1251
    %v1281 = vunpack.c.l.b16 %v1252
    %v1282 = vunpack.c.l.b16 %v1253
    %v1283 = vunpack.c.l.b16 %v1254
    %v1284 = vunpack.c.l.b16 %v1255
    %v1285 = vunpack.c.l.b16 %v1256
    %v1286 = vpack.c.b16 %v1275, %v1274
    %v1287 = vpack.c.b16 %v1277, %v1276
    %v1288 = vpack.c.b16 %v1279, %v1278
    %v1289 = vpack.c.b16 %v1281, %v1280
    %v1290 = vpack.c.b16 %v1283, %v1282
    %v1291 = vpack.c.b16 %v1285, %v1284
    %v1299 = vsel %vm664, %v1243, 0
    %1301 = vmatpush.bf16.msra.mxu0 0
    %1302 = vmatpush.bf16.msra.mxu0 0
    %1303 = vmatpush.bf16.msra.mxu0 %v1291
    %1304 = vmatpush.bf16.msra.mxu0 %v1290
    %1305 = vmatpush.bf16.msra.mxu0 %v1289
    %1306 = vmatpush.bf16.msra.mxu0 %v1288
    %1307 = vmatpush.bf16.msra.mxu0 %v1287
    %1308 = vmatpush.bf16.msra.mxu0 %v1286
    %1309 = vmatmul.bf16.gmra.mxu0 %v1299
    %v1310 = vpop.f32.mrf.mxu0
    %v1311 = vadd.f32 %v1260, %v1310
    %v1312 = vpop.f32.mrf.mxu0
    %v1313 = vadd.f32 %v1260, %v1312
    %1314 = vdwg.mxu0
    %v1315 = vmax.f32 %v1311, 0.0
    %v1316 = vmax.f32 %v1313, 0.0
    %v1317 = vpack.c.bf16 %v827, %v826
    %v1318 = vpack.c.bf16 %v1088, %v1087
    %v1319 = vpack.c.bf16 %v1090, %v1089
    %v1320 = vpack.c.bf16 %v1316, %v1315
    %1321 = vmatpush.bf16.msra.mxu0 0
    %1322 = vmatpush.bf16.msra.mxu0 0
    %1323 = vmatpush.bf16.msra.mxu0 0
    %1324 = vmatpush.bf16.msra.mxu0 0
    %1325 = vmatpush.bf16.msra.mxu0 %v1320
    %1326 = vmatpush.bf16.msra.mxu0 %v1319
    %1327 = vmatpush.bf16.msra.mxu0 %v1318
    %1328 = vmatpush.bf16.msra.mxu0 %v1317
    %1329 = vmatmul.bf16.gmra.mxu0 %v388
    %v1330 = vpop.f32.mrf.mxu0
    %v1331 = vadd.f32 %v826, %v1330
    %v1332 = vpop.f32.mrf.mxu0
    %v1333 = vadd.f32 %v827, %v1332
    %1334 = vmatmul.bf16.gmra.mxu0 %v391
    %v1335 = vpop.f32.mrf.mxu0
    %v1336 = vadd.f32 %v1087, %v1335
    %v1337 = vpop.f32.mrf.mxu0
    %v1338 = vadd.f32 %v1088, %v1337
    %1339 = vmatmul.bf16.gmra.mxu0 %v394
    %v1340 = vpop.f32.mrf.mxu0
    %v1341 = vadd.f32 %v1089, %v1340
    %v1342 = vpop.f32.mrf.mxu0
    %v1343 = vadd.f32 %v1090, %v1342
    %1344 = vmatmul.bf16.gmra.mxu0 %v397
    %v1345 = vpop.f32.mrf.mxu0
    %v1346 = vadd.f32 %v1315, %v1345
    %v1347 = vpop.f32.mrf.mxu0
    %v1348 = vadd.f32 %v1316, %v1347
    %1349 = vdwg.mxu0
    %1350 = vmatpush.bf16.msra.mxu0 0
    %1351 = vmatpush.bf16.msra.mxu0 0
    %1352 = vmatpush.bf16.msra.mxu0 0
    %1353 = vmatpush.bf16.msra.mxu0 0
    %1354 = vmatpush.bf16.msra.mxu0 %v1320
    %1355 = vmatpush.bf16.msra.mxu0 %v1319
    %1356 = vmatpush.bf16.msra.mxu0 %v1318
    %1357 = vmatpush.bf16.msra.mxu0 %v1317
    %1358 = vmatmul.bf16.gmra.mxu0 %v449
    %v1359 = vpop.f32.mrf.mxu0
    %v1360 = vadd.f32 %v826, %v1359
    %v1361 = vpop.f32.mrf.mxu0
    %v1362 = vadd.f32 %v827, %v1361
    %1363 = vmatmul.bf16.gmra.mxu0 %v452
    %v1364 = vpop.f32.mrf.mxu0
    %v1365 = vadd.f32 %v1087, %v1364
    %v1366 = vpop.f32.mrf.mxu0
    %v1367 = vadd.f32 %v1088, %v1366
    %1368 = vmatmul.bf16.gmra.mxu0 %v455
    %v1369 = vpop.f32.mrf.mxu0
    %v1370 = vadd.f32 %v1089, %v1369
    %v1371 = vpop.f32.mrf.mxu0
    %v1372 = vadd.f32 %v1090, %v1371
    %1373 = vmatmul.bf16.gmra.mxu0 %v458
    %v1374 = vpop.f32.mrf.mxu0
    %v1375 = vadd.f32 %v1315, %v1374
    %v1376 = vpop.f32.mrf.mxu0
    %v1377 = vadd.f32 %v1316, %v1376
    %1378 = vdwg.mxu0
    %1379 = vmatpush.bf16.msra.mxu0 0
    %1380 = vmatpush.bf16.msra.mxu0 0
    %1381 = vmatpush.bf16.msra.mxu0 0
    %1382 = vmatpush.bf16.msra.mxu0 0
    %1383 = vmatpush.bf16.msra.mxu0 %v1320
    %1384 = vmatpush.bf16.msra.mxu0 %v1319
    %1385 = vmatpush.bf16.msra.mxu0 %v1318
    %1386 = vmatpush.bf16.msra.mxu0 %v1317
    %1387 = vmatmul.bf16.gmra.mxu0 %v290
    %v1388 = vpop.f32.mrf.mxu0
    %v1389 = vadd.f32 %v826, %v1388
    %v1390 = vpop.f32.mrf.mxu0
    %v1391 = vadd.f32 %v827, %v1390
    %1392 = vmatmul.bf16.gmra.mxu0 %v293
    %v1393 = vpop.f32.mrf.mxu0
    %v1394 = vadd.f32 %v1087, %v1393
    %v1395 = vpop.f32.mrf.mxu0
    %v1396 = vadd.f32 %v1088, %v1395
    %1397 = vmatmul.bf16.gmra.mxu0 %v296
    %v1398 = vpop.f32.mrf.mxu0
    %v1399 = vadd.f32 %v1089, %v1398
    %v1400 = vpop.f32.mrf.mxu0
    %v1401 = vadd.f32 %v1090, %v1400
    %1402 = vmatmul.bf16.gmra.mxu0 %v299
    %v1403 = vpop.f32.mrf.mxu0
    %v1404 = vadd.f32 %v1315, %v1403
    %v1405 = vpop.f32.mrf.mxu0
    %v1406 = vadd.f32 %v1316, %v1405
    %1407 = vdwg.mxu0
    %1416 = vrot.lane.b32.xlu0 %v1360, 32
    %v1417 = vpop.permute.xlu0 %1416
    %1418 = vrot.lane.b32.xlu0 %v1362, 32
    %v1419 = vpop.permute.xlu0 %1418
    %1420 = vrot.lane.b32.xlu0 %v1365, 32
    %v1421 = vpop.permute.xlu0 %1420
    %1422 = vrot.lane.b32.xlu0 %v1367, 32
    %v1423 = vpop.permute.xlu0 %1422
    %1424 = vrot.lane.b32.xlu0 %v1370, 32
    %v1425 = vpop.permute.xlu0 %1424
    %1426 = vrot.lane.b32.xlu0 %v1372, 32
    %v1427 = vpop.permute.xlu0 %1426
    %1428 = vrot.lane.b32.xlu0 %v1375, 32
    %v1429 = vpop.permute.xlu0 %1428
    %1430 = vrot.lane.b32.xlu0 %v1377, 32
    %v1431 = vpop.permute.xlu0 %1430
    %1448 = vrot.lane.b32.xlu0 %v1389, 64
    %v1449 = vpop.permute.xlu0 %1448
    %1450 = vrot.lane.b32.xlu0 %v1391, 64
    %v1451 = vpop.permute.xlu0 %1450
    %1452 = vrot.lane.b32.xlu0 %v1394, 64
    %v1453 = vpop.permute.xlu0 %1452
    %1454 = vrot.lane.b32.xlu0 %v1396, 64
    %v1455 = vpop.permute.xlu0 %1454
    %1456 = vrot.lane.b32.xlu0 %v1399, 64
    %v1457 = vpop.permute.xlu0 %1456
    %1458 = vrot.lane.b32.xlu0 %v1401, 64
    %v1459 = vpop.permute.xlu0 %1458
    %1460 = vrot.lane.b32.xlu0 %v1404, 64
    %v1461 = vpop.permute.xlu0 %1460
    %1462 = vrot.lane.b32.xlu0 %v1406, 64
    %v1463 = vpop.permute.xlu0 %1462
    %v1472 = vsel %vm582, %v1331, %v1417
    %v1473 = vsel %vm582, %v1333, %v1419
    %v1474 = vsel %vm582, %v1336, %v1421
    %v1475 = vsel %vm582, %v1338, %v1423
    %v1476 = vsel %vm582, %v1341, %v1425
    %v1477 = vsel %vm582, %v1343, %v1427
    %v1478 = vsel %vm582, %v1346, %v1429
    %v1479 = vsel %vm582, %v1348, %v1431
    %v1480 = vsel %vm288, %v1472, %v1449
    %v1481 = vsel %vm288, %v1473, %v1451
    %v1482 = vsel %vm288, %v1474, %v1453
    %v1483 = vsel %vm288, %v1475, %v1455
    %v1484 = vsel %vm288, %v1476, %v1457
    %v1485 = vsel %vm288, %v1477, %v1459
    %v1486 = vsel %vm288, %v1478, %v1461
    %v1487 = vsel %vm288, %v1479, %v1463
    %v1488 = vpack.c.bf16 %v1480, %v1480
    %v1489 = vpack.c.bf16 %v1481, %v1481
    %v1490 = vpack.c.bf16 %v1482, %v1482
    %v1491 = vpack.c.bf16 %v1483, %v1483
    %v1492 = vpack.c.bf16 %v1484, %v1484
    %v1493 = vpack.c.bf16 %v1485, %v1485
    %v1494 = vpack.c.bf16 %v1486, %v1486
    %v1495 = vpack.c.bf16 %v1487, %v1487
    %s1496 = scalar_lea.vmem %s9, 144
    %v1497 = vld [vmem:[%s1496] sm:$0xf]
    %v1498 = vld [vmem:[%s1496 + $0x4] sm:$0xf]
    %v1499 = vld [vmem:[%s1496 + $0x8] sm:$0xf]
    %v1500 = vld [vmem:[%s1496 + $0xc] sm:$0xf]
    %v1501 = vld [vmem:[%s1496 + $0x10] sm:$0xf]
    %v1502 = vld [vmem:[%s1496 + $0x14] sm:$0xf]
    %v1503 = vld [vmem:[%s1496 + $0x18] sm:$0xf]
    %v1504 = vld [vmem:[%s1496 + $0x1c] sm:$0xf]
    %v1505 = vld [vmem:[%s1496 + $0x20] sm:$0xf]
    %v1506 = vld [vmem:[%s1496 + $0x24] sm:$0xf]
    %v1507 = vld [vmem:[%s1496 + $0x28] sm:$0xf]
    %v1508 = vld [vmem:[%s1496 + $0x2c] sm:$0xf]
    %s1509 = scalar_lea.vmem [#allocation11], 3
    %v1510 = vld [vmem:[%s1509] sm:$0x1]
    %v1512 = vperm.slane %v1510, 0
    %v1516 = vunpack.c.l.b16 %v1488
    %v1517 = vunpack.c.l.b16 %v1489
    %v1518 = vpack.c.b16 %v1517, %v1516
    %v1531 = vunpack.c.l.b16 %v1497
    %v1532 = vunpack.c.l.b16 %v1498
    %v1533 = vunpack.c.l.b16 %v1499
    %v1534 = vunpack.c.l.b16 %v1500
    %v1535 = vunpack.c.l.b16 %v1501
    %v1536 = vunpack.c.l.b16 %v1502
    %v1537 = vunpack.c.l.b16 %v1503
    %v1538 = vunpack.c.l.b16 %v1504
    %v1539 = vunpack.c.l.b16 %v1505
    %v1540 = vunpack.c.l.b16 %v1506
    %v1541 = vunpack.c.l.b16 %v1507
    %v1542 = vunpack.c.l.b16 %v1508
    %v1543 = vpack.c.b16 %v1532, %v1531
    %v1544 = vpack.c.b16 %v1534, %v1533
    %v1545 = vpack.c.b16 %v1536, %v1535
    %v1546 = vpack.c.b16 %v1538, %v1537
    %v1547 = vpack.c.b16 %v1540, %v1539
    %v1548 = vpack.c.b16 %v1542, %v1541
    %v1556 = vsel %vm664, %v1518, 0
    %1558 = vmatpush.bf16.msra.mxu0 0
    %1559 = vmatpush.bf16.msra.mxu0 0
    %1560 = vmatpush.bf16.msra.mxu0 %v1548
    %1561 = vmatpush.bf16.msra.mxu0 %v1547
    %1562 = vmatpush.bf16.msra.mxu0 %v1546
    %1563 = vmatpush.bf16.msra.mxu0 %v1545
    %1564 = vmatpush.bf16.msra.mxu0 %v1544
    %1565 = vmatpush.bf16.msra.mxu0 %v1543
    %1566 = vmatmul.bf16.gmra.mxu0 %v1556
    %v1567 = vpop.f32.mrf.mxu0
    %v1568 = vadd.f32 %v1512, %v1567
    %v1569 = vpop.f32.mrf.mxu0
    %v1570 = vadd.f32 %v1512, %v1569
    %1571 = vdwg.mxu0
    %v1572 = vmax.f32 %v1568, 0.0
    %v1573 = vmax.f32 %v1570, 0.0
    %v1574 = vpack.c.bf16 %v1573, %v1572
    %s1575 = scalar_lea.vmem [#allocation13], 144
    %v1576 = vld [vmem:[%s1575] sm:$0xf]
    %v1577 = vld [vmem:[%s1575 + $0x4] sm:$0xf]
    %v1578 = vld [vmem:[%s1575 + $0x8] sm:$0xf]
    %v1579 = vld [vmem:[%s1575 + $0xc] sm:$0xf]
    %v1580 = vld [vmem:[%s1575 + $0x10] sm:$0xf]
    %v1581 = vld [vmem:[%s1575 + $0x14] sm:$0xf]
    %v1582 = vld [vmem:[%s1575 + $0x18] sm:$0xf]
    %v1583 = vld [vmem:[%s1575 + $0x1c] sm:$0xf]
    %v1584 = vld [vmem:[%s1575 + $0x20] sm:$0xf]
    %v1585 = vld [vmem:[%s1575 + $0x24] sm:$0xf]
    %v1586 = vld [vmem:[%s1575 + $0x28] sm:$0xf]
    %v1587 = vld [vmem:[%s1575 + $0x2c] sm:$0xf]
    %s1588 = scalar_lea.vmem [#allocation14], 3
    %v1589 = vld [vmem:[%s1588] sm:$0x1]
    %v1591 = vperm.slane %v1589, 0
    %v1605 = vunpack.c.l.b16 %v1576
    %v1606 = vunpack.c.l.b16 %v1577
    %v1607 = vunpack.c.l.b16 %v1578
    %v1608 = vunpack.c.l.b16 %v1579
    %v1609 = vunpack.c.l.b16 %v1580
    %v1610 = vunpack.c.l.b16 %v1581
    %v1611 = vunpack.c.l.b16 %v1582
    %v1612 = vunpack.c.l.b16 %v1583
    %v1613 = vunpack.c.l.b16 %v1584
    %v1614 = vunpack.c.l.b16 %v1585
    %v1615 = vunpack.c.l.b16 %v1586
    %v1616 = vunpack.c.l.b16 %v1587
    %v1617 = vpack.c.b16 %v1606, %v1605
    %v1618 = vpack.c.b16 %v1608, %v1607
    %v1619 = vpack.c.b16 %v1610, %v1609
    %v1620 = vpack.c.b16 %v1612, %v1611
    %v1621 = vpack.c.b16 %v1614, %v1613
    %v1622 = vpack.c.b16 %v1616, %v1615
    %v1630 = vsel %vm664, %v1574, 0
    %1632 = vmatpush.bf16.msra.mxu0 0
    %1633 = vmatpush.bf16.msra.mxu0 0
    %1634 = vmatpush.bf16.msra.mxu0 %v1622
    %1635 = vmatpush.bf16.msra.mxu0 %v1621
    %1636 = vmatpush.bf16.msra.mxu0 %v1620
    %1637 = vmatpush.bf16.msra.mxu0 %v1619
    %1638 = vmatpush.bf16.msra.mxu0 %v1618
    %1639 = vmatpush.bf16.msra.mxu0 %v1617
    %1640 = vmatmul.bf16.gmra.mxu0 %v1630
    %v1641 = vpop.f32.mrf.mxu0
    %v1642 = vadd.f32 %v1591, %v1641
    %v1643 = vpop.f32.mrf.mxu0
    %v1644 = vadd.f32 %v1591, %v1643
    %1645 = vdwg.mxu0
    %v1646 = vmax.f32 %v1642, 0.0
    %v1647 = vmax.f32 %v1644, 0.0
    %v1648 = vpack.c.bf16 %v1647, %v1646
    %s1649 = scalar_lea.vmem %s13, 144
    %v1650 = vld [vmem:[%s1649] sm:$0xf]
    %v1651 = vld [vmem:[%s1649 + $0x4] sm:$0xf]
    %v1652 = vld [vmem:[%s1649 + $0x8] sm:$0xf]
    %v1653 = vld [vmem:[%s1649 + $0xc] sm:$0xf]
    %v1654 = vld [vmem:[%s1649 + $0x10] sm:$0xf]
    %v1655 = vld [vmem:[%s1649 + $0x14] sm:$0xf]
    %v1656 = vld [vmem:[%s1649 + $0x18] sm:$0xf]
    %v1657 = vld [vmem:[%s1649 + $0x1c] sm:$0xf]
    %v1658 = vld [vmem:[%s1649 + $0x20] sm:$0xf]
    %v1659 = vld [vmem:[%s1649 + $0x24] sm:$0xf]
    %v1660 = vld [vmem:[%s1649 + $0x28] sm:$0xf]
    %v1661 = vld [vmem:[%s1649 + $0x2c] sm:$0xf]
    %s1662 = scalar_lea.vmem [#allocation16], 3
    %v1663 = vld [vmem:[%s1662] sm:$0x1]
    %v1665 = vperm.slane %v1663, 0
    %v1679 = vunpack.c.l.b16 %v1650
    %v1680 = vunpack.c.l.b16 %v1651
    %v1681 = vunpack.c.l.b16 %v1652
    %v1682 = vunpack.c.l.b16 %v1653
    %v1683 = vunpack.c.l.b16 %v1654
    %v1684 = vunpack.c.l.b16 %v1655
    %v1685 = vunpack.c.l.b16 %v1656
    %v1686 = vunpack.c.l.b16 %v1657
    %v1687 = vunpack.c.l.b16 %v1658
    %v1688 = vunpack.c.l.b16 %v1659
    %v1689 = vunpack.c.l.b16 %v1660
    %v1690 = vunpack.c.l.b16 %v1661
    %v1691 = vpack.c.b16 %v1680, %v1679
    %v1692 = vpack.c.b16 %v1682, %v1681
    %v1693 = vpack.c.b16 %v1684, %v1683
    %v1694 = vpack.c.b16 %v1686, %v1685
    %v1695 = vpack.c.b16 %v1688, %v1687
    %v1696 = vpack.c.b16 %v1690, %v1689
    %v1704 = vsel %vm664, %v1648, 0
    %1706 = vmatpush.bf16.msra.mxu0 0
    %1707 = vmatpush.bf16.msra.mxu0 0
    %1708 = vmatpush.bf16.msra.mxu0 %v1696
    %1709 = vmatpush.bf16.msra.mxu0 %v1695
    %1710 = vmatpush.bf16.msra.mxu0 %v1694
    %1711 = vmatpush.bf16.msra.mxu0 %v1693
    %1712 = vmatpush.bf16.msra.mxu0 %v1692
    %1713 = vmatpush.bf16.msra.mxu0 %v1691
    %1714 = vmatmul.bf16.gmra.mxu0 %v1704
    %v1715 = vpop.f32.mrf.mxu0
    %v1716 = vadd.f32 %v1665, %v1715
    %v1717 = vpop.f32.mrf.mxu0
    %v1718 = vadd.f32 %v1665, %v1717
    %1719 = vdwg.mxu0
    %v1720 = vmax.f32 %v1716, 0.0
    %v1721 = vmax.f32 %v1718, 0.0
    %s1722 = scalar_lea.vmem %s9, 192
    %v1723 = vld [vmem:[%s1722] sm:$0xf]
    %v1724 = vld [vmem:[%s1722 + $0x4] sm:$0xf]
    %v1725 = vld [vmem:[%s1722 + $0x8] sm:$0xf]
    %v1726 = vld [vmem:[%s1722 + $0xc] sm:$0xf]
    %v1727 = vld [vmem:[%s1722 + $0x10] sm:$0xf]
    %v1728 = vld [vmem:[%s1722 + $0x14] sm:$0xf]
    %v1729 = vld [vmem:[%s1722 + $0x18] sm:$0xf]
    %v1730 = vld [vmem:[%s1722 + $0x1c] sm:$0xf]
    %v1731 = vld [vmem:[%s1722 + $0x20] sm:$0xf]
    %v1732 = vld [vmem:[%s1722 + $0x24] sm:$0xf]
    %v1733 = vld [vmem:[%s1722 + $0x28] sm:$0xf]
    %v1734 = vld [vmem:[%s1722 + $0x2c] sm:$0xf]
    %s1735 = scalar_lea.vmem [#allocation11], 4
    %v1736 = vld [vmem:[%s1735] sm:$0x1]
    %v1738 = vperm.slane %v1736, 0
    %v1744 = vunpack.c.l.b16 %v1490
    %v1745 = vunpack.c.l.b16 %v1491
    %v1746 = vunpack.c.l.b16 %v1492
    %v1747 = vunpack.c.l.b16 %v1493
    %v1748 = vpack.c.b16 %v1745, %v1744
    %v1749 = vpack.c.b16 %v1747, %v1746
    %v1762 = vunpack.c.l.b16 %v1723
    %v1763 = vunpack.c.l.b16 %v1724
    %v1764 = vunpack.c.l.b16 %v1725
    %v1765 = vunpack.c.l.b16 %v1726
    %v1766 = vunpack.c.l.b16 %v1727
    %v1767 = vunpack.c.l.b16 %v1728
    %v1768 = vunpack.c.l.b16 %v1729
    %v1769 = vunpack.c.l.b16 %v1730
    %v1770 = vunpack.c.l.b16 %v1731
    %v1771 = vunpack.c.l.b16 %v1732
    %v1772 = vunpack.c.l.b16 %v1733
    %v1773 = vunpack.c.l.b16 %v1734
    %v1774 = vpack.c.b16 %v1763, %v1762
    %v1775 = vpack.c.b16 %v1765, %v1764
    %v1776 = vpack.c.b16 %v1767, %v1766
    %v1777 = vpack.c.b16 %v1769, %v1768
    %v1778 = vpack.c.b16 %v1771, %v1770
    %v1779 = vpack.c.b16 %v1773, %v1772
    %v1787 = vsel %vm664, %v1748, 0
    %v1790 = vsel %vm664, %v1749, 0
    %1792 = vmatpush.bf16.msra.mxu0 0
    %1793 = vmatpush.bf16.msra.mxu0 0
    %1794 = vmatpush.bf16.msra.mxu0 %v1779
    %1795 = vmatpush.bf16.msra.mxu0 %v1778
    %1796 = vmatpush.bf16.msra.mxu0 %v1777
    %1797 = vmatpush.bf16.msra.mxu0 %v1776
    %1798 = vmatpush.bf16.msra.mxu0 %v1775
    %1799 = vmatpush.bf16.msra.mxu0 %v1774
    %1800 = vmatmul.bf16.gmra.mxu0 %v1787
    %v1801 = vpop.f32.mrf.mxu0
    %v1802 = vadd.f32 %v1738, %v1801
    %v1803 = vpop.f32.mrf.mxu0
    %v1804 = vadd.f32 %v1738, %v1803
    %1805 = vmatmul.bf16.gmra.mxu0 %v1790
    %v1806 = vpop.f32.mrf.mxu0
    %v1807 = vadd.f32 %v1738, %v1806
    %v1808 = vpop.f32.mrf.mxu0
    %v1809 = vadd.f32 %v1738, %v1808
    %1810 = vdwg.mxu0
    %v1811 = vmax.f32 %v1802, 0.0
    %v1812 = vmax.f32 %v1804, 0.0
    %v1813 = vmax.f32 %v1807, 0.0
    %v1814 = vmax.f32 %v1809, 0.0
    %v1815 = vpack.c.bf16 %v1812, %v1811
    %v1816 = vpack.c.bf16 %v1814, %v1813
    %s1817 = scalar_lea.vmem [#allocation13], 192
    %v1818 = vld [vmem:[%s1817] sm:$0xf]
    %v1819 = vld [vmem:[%s1817 + $0x4] sm:$0xf]
    %v1820 = vld [vmem:[%s1817 + $0x8] sm:$0xf]
    %v1821 = vld [vmem:[%s1817 + $0xc] sm:$0xf]
    %v1822 = vld [vmem:[%s1817 + $0x10] sm:$0xf]
    %v1823 = vld [vmem:[%s1817 + $0x14] sm:$0xf]
    %v1824 = vld [vmem:[%s1817 + $0x18] sm:$0xf]
    %v1825 = vld [vmem:[%s1817 + $0x1c] sm:$0xf]
    %v1826 = vld [vmem:[%s1817 + $0x20] sm:$0xf]
    %v1827 = vld [vmem:[%s1817 + $0x24] sm:$0xf]
    %v1828 = vld [vmem:[%s1817 + $0x28] sm:$0xf]
    %v1829 = vld [vmem:[%s1817 + $0x2c] sm:$0xf]
    %s1830 = scalar_lea.vmem [#allocation14], 4
    %v1831 = vld [vmem:[%s1830] sm:$0x1]
    %v1833 = vperm.slane %v1831, 0
    %v1847 = vunpack.c.l.b16 %v1818
    %v1848 = vunpack.c.l.b16 %v1819
    %v1849 = vunpack.c.l.b16 %v1820
    %v1850 = vunpack.c.l.b16 %v1821
    %v1851 = vunpack.c.l.b16 %v1822
    %v1852 = vunpack.c.l.b16 %v1823
    %v1853 = vunpack.c.l.b16 %v1824
    %v1854 = vunpack.c.l.b16 %v1825
    %v1855 = vunpack.c.l.b16 %v1826
    %v1856 = vunpack.c.l.b16 %v1827
    %v1857 = vunpack.c.l.b16 %v1828
    %v1858 = vunpack.c.l.b16 %v1829
    %v1859 = vpack.c.b16 %v1848, %v1847
    %v1860 = vpack.c.b16 %v1850, %v1849
    %v1861 = vpack.c.b16 %v1852, %v1851
    %v1862 = vpack.c.b16 %v1854, %v1853
    %v1863 = vpack.c.b16 %v1856, %v1855
    %v1864 = vpack.c.b16 %v1858, %v1857
    %v1872 = vsel %vm664, %v1815, 0
    %v1875 = vsel %vm664, %v1816, 0
    %1877 = vmatpush.bf16.msra.mxu0 0
    %1878 = vmatpush.bf16.msra.mxu0 0
    %1879 = vmatpush.bf16.msra.mxu0 %v1864
    %1880 = vmatpush.bf16.msra.mxu0 %v1863
    %1881 = vmatpush.bf16.msra.mxu0 %v1862
    %1882 = vmatpush.bf16.msra.mxu0 %v1861
    %1883 = vmatpush.bf16.msra.mxu0 %v1860
    %1884 = vmatpush.bf16.msra.mxu0 %v1859
    %1885 = vmatmul.bf16.gmra.mxu0 %v1872
    %v1886 = vpop.f32.mrf.mxu0
    %v1887 = vadd.f32 %v1833, %v1886
    %v1888 = vpop.f32.mrf.mxu0
    %v1889 = vadd.f32 %v1833, %v1888
    %1890 = vmatmul.bf16.gmra.mxu0 %v1875
    %v1891 = vpop.f32.mrf.mxu0
    %v1892 = vadd.f32 %v1833, %v1891
    %v1893 = vpop.f32.mrf.mxu0
    %v1894 = vadd.f32 %v1833, %v1893
    %1895 = vdwg.mxu0
    %v1896 = vmax.f32 %v1887, 0.0
    %v1897 = vmax.f32 %v1889, 0.0
    %v1898 = vmax.f32 %v1892, 0.0
    %v1899 = vmax.f32 %v1894, 0.0
    %v1900 = vpack.c.bf16 %v1897, %v1896
    %v1901 = vpack.c.bf16 %v1899, %v1898
    %s1902 = scalar_lea.vmem %s13, 192
    %v1903 = vld [vmem:[%s1902] sm:$0xf]
    %v1904 = vld [vmem:[%s1902 + $0x4] sm:$0xf]
    %v1905 = vld [vmem:[%s1902 + $0x8] sm:$0xf]
    %v1906 = vld [vmem:[%s1902 + $0xc] sm:$0xf]
    %v1907 = vld [vmem:[%s1902 + $0x10] sm:$0xf]
    %v1908 = vld [vmem:[%s1902 + $0x14] sm:$0xf]
    %v1909 = vld [vmem:[%s1902 + $0x18] sm:$0xf]
    %v1910 = vld [vmem:[%s1902 + $0x1c] sm:$0xf]
    %v1911 = vld [vmem:[%s1902 + $0x20] sm:$0xf]
    %v1912 = vld [vmem:[%s1902 + $0x24] sm:$0xf]
    %v1913 = vld [vmem:[%s1902 + $0x28] sm:$0xf]
    %v1914 = vld [vmem:[%s1902 + $0x2c] sm:$0xf]
    %s1915 = scalar_lea.vmem [#allocation16], 4
    %v1916 = vld [vmem:[%s1915] sm:$0x1]
    %v1918 = vperm.slane %v1916, 0
    %v1932 = vunpack.c.l.b16 %v1903
    %v1933 = vunpack.c.l.b16 %v1904
    %v1934 = vunpack.c.l.b16 %v1905
    %v1935 = vunpack.c.l.b16 %v1906
    %v1936 = vunpack.c.l.b16 %v1907
    %v1937 = vunpack.c.l.b16 %v1908
    %v1938 = vunpack.c.l.b16 %v1909
    %v1939 = vunpack.c.l.b16 %v1910
    %v1940 = vunpack.c.l.b16 %v1911
    %v1941 = vunpack.c.l.b16 %v1912
    %v1942 = vunpack.c.l.b16 %v1913
    %v1943 = vunpack.c.l.b16 %v1914
    %v1944 = vpack.c.b16 %v1933, %v1932
    %v1945 = vpack.c.b16 %v1935, %v1934
    %v1946 = vpack.c.b16 %v1937, %v1936
    %v1947 = vpack.c.b16 %v1939, %v1938
    %v1948 = vpack.c.b16 %v1941, %v1940
    %v1949 = vpack.c.b16 %v1943, %v1942
    %v1957 = vsel %vm664, %v1900, 0
    %v1960 = vsel %vm664, %v1901, 0
    %1962 = vmatpush.bf16.msra.mxu0 0
    %1963 = vmatpush.bf16.msra.mxu0 0
    %1964 = vmatpush.bf16.msra.mxu0 %v1949
    %1965 = vmatpush.bf16.msra.mxu0 %v1948
    %1966 = vmatpush.bf16.msra.mxu0 %v1947
    %1967 = vmatpush.bf16.msra.mxu0 %v1946
    %1968 = vmatpush.bf16.msra.mxu0 %v1945
    %1969 = vmatpush.bf16.msra.mxu0 %v1944
    %1970 = vmatmul.bf16.gmra.mxu0 %v1957
    %v1971 = vpop.f32.mrf.mxu0
    %v1972 = vadd.f32 %v1918, %v1971
    %v1973 = vpop.f32.mrf.mxu0
    %v1974 = vadd.f32 %v1918, %v1973
    %1975 = vmatmul.bf16.gmra.mxu0 %v1960
    %v1976 = vpop.f32.mrf.mxu0
    %v1977 = vadd.f32 %v1918, %v1976
    %v1978 = vpop.f32.mrf.mxu0
    %v1979 = vadd.f32 %v1918, %v1978
    %1980 = vdwg.mxu0
    %v1981 = vmax.f32 %v1972, 0.0
    %v1982 = vmax.f32 %v1974, 0.0
    %v1983 = vmax.f32 %v1977, 0.0
    %v1984 = vmax.f32 %v1979, 0.0
    %s1985 = scalar_lea.vmem %s9, 240
    %v1986 = vld [vmem:[%s1985] sm:$0xf]
    %v1987 = vld [vmem:[%s1985 + $0x4] sm:$0xf]
    %v1988 = vld [vmem:[%s1985 + $0x8] sm:$0xf]
    %v1989 = vld [vmem:[%s1985 + $0xc] sm:$0xf]
    %v1990 = vld [vmem:[%s1985 + $0x10] sm:$0xf]
    %v1991 = vld [vmem:[%s1985 + $0x14] sm:$0xf]
    %v1992 = vld [vmem:[%s1985 + $0x18] sm:$0xf]
    %v1993 = vld [vmem:[%s1985 + $0x1c] sm:$0xf]
    %v1994 = vld [vmem:[%s1985 + $0x20] sm:$0xf]
    %v1995 = vld [vmem:[%s1985 + $0x24] sm:$0xf]
    %v1996 = vld [vmem:[%s1985 + $0x28] sm:$0xf]
    %v1997 = vld [vmem:[%s1985 + $0x2c] sm:$0xf]
    %s1998 = scalar_lea.vmem [#allocation11], 5
    %v1999 = vld [vmem:[%s1998] sm:$0x1]
    %v2001 = vperm.slane %v1999, 0
    %v2005 = vunpack.c.l.b16 %v1494
    %v2006 = vunpack.c.l.b16 %v1495
    %v2007 = vpack.c.b16 %v2006, %v2005
    %v2020 = vunpack.c.l.b16 %v1986
    %v2021 = vunpack.c.l.b16 %v1987
    %v2022 = vunpack.c.l.b16 %v1988
    %v2023 = vunpack.c.l.b16 %v1989
    %v2024 = vunpack.c.l.b16 %v1990
    %v2025 = vunpack.c.l.b16 %v1991
    %v2026 = vunpack.c.l.b16 %v1992
    %v2027 = vunpack.c.l.b16 %v1993
    %v2028 = vunpack.c.l.b16 %v1994
    %v2029 = vunpack.c.l.b16 %v1995
    %v2030 = vunpack.c.l.b16 %v1996
    %v2031 = vunpack.c.l.b16 %v1997
    %v2032 = vpack.c.b16 %v2021, %v2020
    %v2033 = vpack.c.b16 %v2023, %v2022
    %v2034 = vpack.c.b16 %v2025, %v2024
    %v2035 = vpack.c.b16 %v2027, %v2026
    %v2036 = vpack.c.b16 %v2029, %v2028
    %v2037 = vpack.c.b16 %v2031, %v2030
    %v2045 = vsel %vm664, %v2007, 0
    %2047 = vmatpush.bf16.msra.mxu0 0
    %2048 = vmatpush.bf16.msra.mxu0 0
    %2049 = vmatpush.bf16.msra.mxu0 %v2037
    %2050 = vmatpush.bf16.msra.mxu0 %v2036
    %2051 = vmatpush.bf16.msra.mxu0 %v2035
    %2052 = vmatpush.bf16.msra.mxu0 %v2034
    %2053 = vmatpush.bf16.msra.mxu0 %v2033
    %2054 = vmatpush.bf16.msra.mxu0 %v2032
    %2055 = vmatmul.bf16.gmra.mxu0 %v2045
    %v2056 = vpop.f32.mrf.mxu0
    %v2057 = vadd.f32 %v2001, %v2056
    %v2058 = vpop.f32.mrf.mxu0
    %v2059 = vadd.f32 %v2001, %v2058
    %2060 = vdwg.mxu0
    %v2061 = vmax.f32 %v2057, 0.0
    %v2062 = vmax.f32 %v2059, 0.0
    %v2063 = vpack.c.bf16 %v2062, %v2061
    %s2064 = scalar_lea.vmem [#allocation13], 240
    %v2065 = vld [vmem:[%s2064] sm:$0xf]
    %v2066 = vld [vmem:[%s2064 + $0x4] sm:$0xf]
    %v2067 = vld [vmem:[%s2064 + $0x8] sm:$0xf]
    %v2068 = vld [vmem:[%s2064 + $0xc] sm:$0xf]
    %v2069 = vld [vmem:[%s2064 + $0x10] sm:$0xf]
    %v2070 = vld [vmem:[%s2064 + $0x14] sm:$0xf]
    %v2071 = vld [vmem:[%s2064 + $0x18] sm:$0xf]
    %v2072 = vld [vmem:[%s2064 + $0x1c] sm:$0xf]
    %v2073 = vld [vmem:[%s2064 + $0x20] sm:$0xf]
    %v2074 = vld [vmem:[%s2064 + $0x24] sm:$0xf]
    %v2075 = vld [vmem:[%s2064 + $0x28] sm:$0xf]
    %v2076 = vld [vmem:[%s2064 + $0x2c] sm:$0xf]
    %s2077 = scalar_lea.vmem [#allocation14], 5
    %v2078 = vld [vmem:[%s2077] sm:$0x1]
    %v2080 = vperm.slane %v2078, 0
    %v2094 = vunpack.c.l.b16 %v2065
    %v2095 = vunpack.c.l.b16 %v2066
    %v2096 = vunpack.c.l.b16 %v2067
    %v2097 = vunpack.c.l.b16 %v2068
    %v2098 = vunpack.c.l.b16 %v2069
    %v2099 = vunpack.c.l.b16 %v2070
    %v2100 = vunpack.c.l.b16 %v2071
    %v2101 = vunpack.c.l.b16 %v2072
    %v2102 = vunpack.c.l.b16 %v2073
    %v2103 = vunpack.c.l.b16 %v2074
    %v2104 = vunpack.c.l.b16 %v2075
    %v2105 = vunpack.c.l.b16 %v2076
    %v2106 = vpack.c.b16 %v2095, %v2094
    %v2107 = vpack.c.b16 %v2097, %v2096
    %v2108 = vpack.c.b16 %v2099, %v2098
    %v2109 = vpack.c.b16 %v2101, %v2100
    %v2110 = vpack.c.b16 %v2103, %v2102
    %v2111 = vpack.c.b16 %v2105, %v2104
    %v2119 = vsel %vm664, %v2063, 0
    %2121 = vmatpush.bf16.msra.mxu0 0
    %2122 = vmatpush.bf16.msra.mxu0 0
    %2123 = vmatpush.bf16.msra.mxu0 %v2111
    %2124 = vmatpush.bf16.msra.mxu0 %v2110
    %2125 = vmatpush.bf16.msra.mxu0 %v2109
    %2126 = vmatpush.bf16.msra.mxu0 %v2108
    %2127 = vmatpush.bf16.msra.mxu0 %v2107
    %2128 = vmatpush.bf16.msra.mxu0 %v2106
    %2129 = vmatmul.bf16.gmra.mxu0 %v2119
    %v2130 = vpop.f32.mrf.mxu0
    %v2131 = vadd.f32 %v2080, %v2130
    %v2132 = vpop.f32.mrf.mxu0
    %v2133 = vadd.f32 %v2080, %v2132
    %2134 = vdwg.mxu0
    %v2135 = vmax.f32 %v2131, 0.0
    %v2136 = vmax.f32 %v2133, 0.0
    %v2137 = vpack.c.bf16 %v2136, %v2135
    %s2138 = scalar_lea.vmem %s13, 240
    %v2139 = vld [vmem:[%s2138] sm:$0xf]
    %v2140 = vld [vmem:[%s2138 + $0x4] sm:$0xf]
    %v2141 = vld [vmem:[%s2138 + $0x8] sm:$0xf]
    %v2142 = vld [vmem:[%s2138 + $0xc] sm:$0xf]
    %v2143 = vld [vmem:[%s2138 + $0x10] sm:$0xf]
    %v2144 = vld [vmem:[%s2138 + $0x14] sm:$0xf]
    %v2145 = vld [vmem:[%s2138 + $0x18] sm:$0xf]
    %v2146 = vld [vmem:[%s2138 + $0x1c] sm:$0xf]
    %v2147 = vld [vmem:[%s2138 + $0x20] sm:$0xf]
    %v2148 = vld [vmem:[%s2138 + $0x24] sm:$0xf]
    %v2149 = vld [vmem:[%s2138 + $0x28] sm:$0xf]
    %v2150 = vld [vmem:[%s2138 + $0x2c] sm:$0xf]
    %s2151 = scalar_lea.vmem [#allocation16], 5
    %v2152 = vld [vmem:[%s2151] sm:$0x1]
    %v2154 = vperm.slane %v2152, 0
    %v2168 = vunpack.c.l.b16 %v2139
    %v2169 = vunpack.c.l.b16 %v2140
    %v2170 = vunpack.c.l.b16 %v2141
    %v2171 = vunpack.c.l.b16 %v2142
    %v2172 = vunpack.c.l.b16 %v2143
    %v2173 = vunpack.c.l.b16 %v2144
    %v2174 = vunpack.c.l.b16 %v2145
    %v2175 = vunpack.c.l.b16 %v2146
    %v2176 = vunpack.c.l.b16 %v2147
    %v2177 = vunpack.c.l.b16 %v2148
    %v2178 = vunpack.c.l.b16 %v2149
    %v2179 = vunpack.c.l.b16 %v2150
    %v2180 = vpack.c.b16 %v2169, %v2168
    %v2181 = vpack.c.b16 %v2171, %v2170
    %v2182 = vpack.c.b16 %v2173, %v2172
    %v2183 = vpack.c.b16 %v2175, %v2174
    %v2184 = vpack.c.b16 %v2177, %v2176
    %v2185 = vpack.c.b16 %v2179, %v2178
    %v2193 = vsel %vm664, %v2137, 0
    %2195 = vmatpush.bf16.msra.mxu0 0
    %2196 = vmatpush.bf16.msra.mxu0 0
    %2197 = vmatpush.bf16.msra.mxu0 %v2185
    %2198 = vmatpush.bf16.msra.mxu0 %v2184
    %2199 = vmatpush.bf16.msra.mxu0 %v2183
    %2200 = vmatpush.bf16.msra.mxu0 %v2182
    %2201 = vmatpush.bf16.msra.mxu0 %v2181
    %2202 = vmatpush.bf16.msra.mxu0 %v2180
    %2203 = vmatmul.bf16.gmra.mxu0 %v2193
    %v2204 = vpop.f32.mrf.mxu0
    %v2205 = vadd.f32 %v2154, %v2204
    %v2206 = vpop.f32.mrf.mxu0
    %v2207 = vadd.f32 %v2154, %v2206
    %2208 = vdwg.mxu0
    %v2209 = vmax.f32 %v2205, 0.0
    %v2210 = vmax.f32 %v2207, 0.0
    %v2211 = vpack.c.bf16 %v1720, %v1720
    %v2212 = vpack.c.bf16 %v1721, %v1721
    %v2213 = vpack.c.bf16 %v1981, %v1981
    %v2214 = vpack.c.bf16 %v1982, %v1982
    %v2215 = vpack.c.bf16 %v1983, %v1983
    %v2216 = vpack.c.bf16 %v1984, %v1984
    %v2217 = vpack.c.bf16 %v2209, %v2209
    %v2218 = vpack.c.bf16 %v2210, %v2210
    %v2219 = vld [vmem:[%s4] sm:$0x1]
    %v2222 = vunpack.c.l.b16 %v2211
    %v2223 = vunpack.c.l.b16 %v2212
    %v2224 = vpack.c.b16 %v2223, %v2222
    %vm2226 = vcmask 130048
    %v2228 = vsel %vm2226, %v2219, 0
    %2230 = vmatpush.bf16.msra.mxu0 0
    %2231 = vmatpush.bf16.msra.mxu0 0
    %2232 = vmatpush.bf16.msra.mxu0 0
    %2233 = vmatpush.bf16.msra.mxu0 0
    %2234 = vmatpush.bf16.msra.mxu0 0
    %2235 = vmatpush.bf16.msra.mxu0 0
    %2236 = vmatpush.bf16.msra.mxu0 0
    %2237 = vmatpush.bf16.msra.mxu0 %v2224
    %2238 = vmatmul.bf16.gmra.mxu0 %v2228
    %v2239 = vpop.f32.mrf.mxu0
    %v2240 = vadd.f32 0.0, %v2239
    %v2241 = vpop.f32.mrf.mxu0
    %2242 = vdwg.mxu0
    %v2243 = vld [vmem:[#allocation7] sm:$0x1]
    %v2248 = vunpack.c.l.b16 %v2213
    %v2249 = vunpack.c.l.b16 %v2214
    %v2250 = vunpack.c.l.b16 %v2215
    %v2251 = vunpack.c.l.b16 %v2216
    %v2252 = vpack.c.b16 %v2249, %v2248
    %v2253 = vpack.c.b16 %v2251, %v2250
    %v2257 = vsel %vm582, %v2243, 0
    %2259 = vmatpush.bf16.msra.mxu0 0
    %2260 = vmatpush.bf16.msra.mxu0 0
    %2261 = vmatpush.bf16.msra.mxu0 0
    %2262 = vmatpush.bf16.msra.mxu0 0
    %2263 = vmatpush.bf16.msra.mxu0 0
    %2264 = vmatpush.bf16.msra.mxu0 0
    %2265 = vmatpush.bf16.msra.mxu0 %v2253
    %2266 = vmatpush.bf16.msra.mxu0 %v2252
    %2267 = vmatmul.bf16.gmra.mxu0 %v2257
    %v2268 = vpop.f32.mrf.mxu0
    %v2269 = vadd.f32 0.0, %v2268
    %v2270 = vpop.f32.mrf.mxu0
    %2271 = vdwg.mxu0
    %v2272 = vld [vmem:[#allocation8] sm:$0x1]
    %v2275 = vunpack.c.l.b16 %v2217
    %v2276 = vunpack.c.l.b16 %v2218
    %v2277 = vpack.c.b16 %v2276, %v2275
    %v2280 = vsel %vm2226, %v2272, 0
    %2282 = vmatpush.bf16.msra.mxu0 0
    %2283 = vmatpush.bf16.msra.mxu0 0
    %2284 = vmatpush.bf16.msra.mxu0 0
    %2285 = vmatpush.bf16.msra.mxu0 0
    %2286 = vmatpush.bf16.msra.mxu0 0
    %2287 = vmatpush.bf16.msra.mxu0 0
    %2288 = vmatpush.bf16.msra.mxu0 0
    %2289 = vmatpush.bf16.msra.mxu0 %v2277
    %2290 = vmatmul.bf16.gmra.mxu0 %v2280
    %v2291 = vpop.f32.mrf.mxu0
    %v2292 = vadd.f32 0.0, %v2291
    %v2293 = vpop.f32.mrf.mxu0
    %2294 = vdwg.mxu0
    %2296 = vrot.lane.b32.xlu0 %v2269, 32
    %v2297 = vpop.permute.xlu0 %2296
    %2300 = vrot.lane.b32.xlu0 %v2292, 64
    %v2301 = vpop.permute.xlu0 %2300
    %v2303 = vsel %vm582, %v2240, %v2297
    %v2304 = vsel %vm288, %v2303, %v2301
    %v2305 = vpack.c.bf16 %v2304, %v2304
    %v2306 = vld [vmem:[%s15] sm:$0xff]
    %v2307 = vld [vmem:[%s15 + $0x8] sm:$0xff]
    %v2308 = vld [vmem:[%s15 + $0x10] sm:$0xff]
    %v2309 = vld [vmem:[%s15 + $0x18] sm:$0xff]
    %v2310 = vld [vmem:[%s15 + $0x20] sm:$0xff]
    %v2311 = vld [vmem:[%s15 + $0x28] sm:$0xff]
    %v2312 = vld [vmem:[%s15 + $0x30] sm:$0xff]
    %v2313 = vld [vmem:[%s15 + $0x38] sm:$0xff]
    %v2314 = vld [vmem:[%s15 + $0x40] sm:$0xff]
    %v2315 = vld [vmem:[%s15 + $0x48] sm:$0xff]
    %v2316 = vld [vmem:[%s15 + $0x50] sm:$0xff]
    %v2317 = vld [vmem:[%s15 + $0x58] sm:$0xff]
    %v2318 = vld [vmem:[#allocation17] sm:$0x3]
    %v2320 = vperm.slane %v2318, 0
    %v2321 = vperm.slane %v2318, 1
    %v2336 = vunpack.c.l.b16 %v2306
    %v2337 = vunpack.c.h.b16 %v2306
    %v2338 = vunpack.c.l.b16 %v2307
    %v2339 = vunpack.c.h.b16 %v2307
    %v2340 = vunpack.c.l.b16 %v2308
    %v2341 = vunpack.c.h.b16 %v2308
    %v2342 = vunpack.c.l.b16 %v2309
    %v2343 = vunpack.c.h.b16 %v2309
    %v2344 = vunpack.c.l.b16 %v2310
    %v2345 = vunpack.c.h.b16 %v2310
    %v2346 = vunpack.c.l.b16 %v2311
    %v2347 = vunpack.c.h.b16 %v2311
    %v2348 = vunpack.c.l.b16 %v2312
    %v2349 = vunpack.c.h.b16 %v2312
    %v2350 = vunpack.c.l.b16 %v2313
    %v2351 = vunpack.c.h.b16 %v2313
    %v2352 = vunpack.c.l.b16 %v2314
    %v2353 = vunpack.c.h.b16 %v2314
    %v2354 = vunpack.c.l.b16 %v2315
    %v2355 = vunpack.c.h.b16 %v2315
    %v2356 = vunpack.c.l.b16 %v2316
    %v2357 = vunpack.c.h.b16 %v2316
    %v2358 = vunpack.c.l.b16 %v2317
    %v2359 = vunpack.c.h.b16 %v2317
    %v2360 = vpack.c.b16 %v2338, %v2336
    %v2361 = vpack.c.b16 %v2339, %v2337
    %v2362 = vpack.c.b16 %v2342, %v2340
    %v2363 = vpack.c.b16 %v2343, %v2341
    %v2364 = vpack.c.b16 %v2346, %v2344
    %v2365 = vpack.c.b16 %v2347, %v2345
    %v2366 = vpack.c.b16 %v2350, %v2348
    %v2367 = vpack.c.b16 %v2351, %v2349
    %v2368 = vpack.c.b16 %v2354, %v2352
    %v2369 = vpack.c.b16 %v2355, %v2353
    %v2370 = vpack.c.b16 %v2358, %v2356
    %v2371 = vpack.c.b16 %v2359, %v2357
    %v2385 = vsel %vm664, %v2305, 0
    %2387 = vmatpush.bf16.msra.mxu0 0
    %2388 = vmatpush.bf16.msra.mxu0 0
    %2389 = vmatpush.bf16.msra.mxu0 %v2370
    %2390 = vmatpush.bf16.msra.mxu0 %v2368
    %2391 = vmatpush.bf16.msra.mxu0 %v2366
    %2392 = vmatpush.bf16.msra.mxu0 %v2364
    %2393 = vmatpush.bf16.msra.mxu0 %v2362
    %2394 = vmatpush.bf16.msra.mxu0 %v2360
    %2395 = vmatmul.bf16.gmra.mxu0 %v2385
    %v2396 = vpop.f32.mrf.mxu0
    %v2397 = vadd.f32 %v2320, %v2396
    %v2398 = vpop.f32.mrf.mxu0
    %2399 = vdwg.mxu0
    %2400 = vmatpush.bf16.msra.mxu0 0
    %2401 = vmatpush.bf16.msra.mxu0 0
    %2402 = vmatpush.bf16.msra.mxu0 %v2371
    %2403 = vmatpush.bf16.msra.mxu0 %v2369
    %2404 = vmatpush.bf16.msra.mxu0 %v2367
    %2405 = vmatpush.bf16.msra.mxu0 %v2365
    %2406 = vmatpush.bf16.msra.mxu0 %v2363
    %2407 = vmatpush.bf16.msra.mxu0 %v2361
    %2408 = vmatmul.bf16.gmra.mxu0 %v2385
    %v2409 = vpop.f32.mrf.mxu0
    %v2410 = vadd.f32 %v2321, %v2409
    %v2411 = vpop.f32.mrf.mxu0
    %2412 = vdwg.mxu0
    %v2413 = vmax.f32 %v2397, 0.0
    %v2414 = vmax.f32 %v2410, 0.0
    %v2415 = vpack.c.bf16 %v2413, %v2413
    %v2416 = vpack.c.bf16 %v2414, %v2414
    %v2417 = vld [vmem:[%s17] sm:$0xf]
    %v2418 = vld [vmem:[%s17 + $0x4] sm:$0xf]
    %v2419 = vld [vmem:[%s17 + $0x8] sm:$0xf]
    %v2420 = vld [vmem:[%s17 + $0xc] sm:$0xf]
    %v2421 = vld [vmem:[%s17 + $0x10] sm:$0xf]
    %v2422 = vld [vmem:[%s17 + $0x14] sm:$0xf]
    %v2423 = vld [vmem:[%s17 + $0x18] sm:$0xf]
    %v2424 = vld [vmem:[%s17 + $0x1c] sm:$0xf]
    %v2425 = vld [vmem:[%s17 + $0x20] sm:$0xf]
    %v2426 = vld [vmem:[%s17 + $0x24] sm:$0xf]
    %v2427 = vld [vmem:[%s17 + $0x28] sm:$0xf]
    %v2428 = vld [vmem:[%s17 + $0x2c] sm:$0xf]
    %v2429 = vld [vmem:[%s17 + $0x30] sm:$0xf]
    %v2430 = vld [vmem:[%s17 + $0x34] sm:$0xf]
    %v2431 = vld [vmem:[%s17 + $0x38] sm:$0xf]
    %v2432 = vld [vmem:[%s17 + $0x3c] sm:$0xf]
    %v2433 = vld [vmem:[%s17 + $0x40] sm:$0xf]
    %v2434 = vld [vmem:[%s17 + $0x44] sm:$0xf]
    %v2435 = vld [vmem:[%s17 + $0x48] sm:$0xf]
    %v2436 = vld [vmem:[%s17 + $0x4c] sm:$0xf]
    %v2437 = vld [vmem:[%s17 + $0x50] sm:$0xf]
    %v2438 = vld [vmem:[%s17 + $0x54] sm:$0xf]
    %v2439 = vld [vmem:[%s17 + $0x58] sm:$0xf]
    %v2440 = vld [vmem:[%s17 + $0x5c] sm:$0xf]
    %v2441 = vld [vmem:[%s18] sm:$0x1]
    %v2443 = vperm.slane %v2441, 0
    %v2469 = vunpack.c.l.b16 %v2417
    %v2470 = vunpack.c.l.b16 %v2418
    %v2471 = vunpack.c.l.b16 %v2419
    %v2472 = vunpack.c.l.b16 %v2420
    %v2473 = vunpack.c.l.b16 %v2421
    %v2474 = vunpack.c.l.b16 %v2422
    %v2475 = vunpack.c.l.b16 %v2423
    %v2476 = vunpack.c.l.b16 %v2424
    %v2477 = vunpack.c.l.b16 %v2425
    %v2478 = vunpack.c.l.b16 %v2426
    %v2479 = vunpack.c.l.b16 %v2427
    %v2480 = vunpack.c.l.b16 %v2428
    %v2481 = vunpack.c.l.b16 %v2429
    %v2482 = vunpack.c.l.b16 %v2430
    %v2483 = vunpack.c.l.b16 %v2431
    %v2484 = vunpack.c.l.b16 %v2432
    %v2485 = vunpack.c.l.b16 %v2433
    %v2486 = vunpack.c.l.b16 %v2434
    %v2487 = vunpack.c.l.b16 %v2435
    %v2488 = vunpack.c.l.b16 %v2436
    %v2489 = vunpack.c.l.b16 %v2437
    %v2490 = vunpack.c.l.b16 %v2438
    %v2491 = vunpack.c.l.b16 %v2439
    %v2492 = vunpack.c.l.b16 %v2440
    %v2493 = vpack.c.b16 %v2470, %v2469
    %v2494 = vpack.c.b16 %v2472, %v2471
    %v2495 = vpack.c.b16 %v2474, %v2473
    %v2496 = vpack.c.b16 %v2476, %v2475
    %v2497 = vpack.c.b16 %v2478, %v2477
    %v2498 = vpack.c.b16 %v2480, %v2479
    %v2499 = vpack.c.b16 %v2482, %v2481
    %v2500 = vpack.c.b16 %v2484, %v2483
    %v2501 = vpack.c.b16 %v2486, %v2485
    %v2502 = vpack.c.b16 %v2488, %v2487
    %v2503 = vpack.c.b16 %v2490, %v2489
    %v2504 = vpack.c.b16 %v2492, %v2491
    %v2518 = vsel %vm288, %v2416, 0
    %2520 = vmatpush.bf16.msra.mxu0 %v2500
    %2521 = vmatpush.bf16.msra.mxu0 %v2499
    %2522 = vmatpush.bf16.msra.mxu0 %v2498
    %2523 = vmatpush.bf16.msra.mxu0 %v2497
    %2524 = vmatpush.bf16.msra.mxu0 %v2496
    %2525 = vmatpush.bf16.msra.mxu0 %v2495
    %2526 = vmatpush.bf16.msra.mxu0 %v2494
    %2527 = vmatpush.bf16.msra.mxu0 %v2493
    %2528 = vmatmul.bf16.gmra.mxu0 %v2415
    %v2529 = vpop.f32.mrf.mxu0
    %v2530 = vadd.f32 %v2443, %v2529
    %v2531 = vpop.f32.mrf.mxu0
    %2532 = vdwg.mxu0
    %2533 = vmatpush.bf16.msra.mxu0 0
    %2534 = vmatpush.bf16.msra.mxu0 0
    %2535 = vmatpush.bf16.msra.mxu0 0
    %2536 = vmatpush.bf16.msra.mxu0 0
    %2537 = vmatpush.bf16.msra.mxu0 %v2504
    %2538 = vmatpush.bf16.msra.mxu0 %v2503
    %2539 = vmatpush.bf16.msra.mxu0 %v2502
    %2540 = vmatpush.bf16.msra.mxu0 %v2501
    %2541 = vmatmul.bf16.gmra.mxu0 %v2518
    %v2542 = vpop.f32.mrf.mxu0
    %v2543 = vadd.f32 %v2530, %v2542
    %v2544 = vpop.f32.mrf.mxu0
    %2545 = vdwg.mxu0
    %vm2546 = vcmask 17408
    %2547 = vst.msk [vmem:[#allocation19] sm:$0x3] %vm2546, %v2543
    // Predicated region
    $region118: #{tpu_custom_call.1} parent=1 // pred_check
      _
    $region119: #{tpu_custom_call.1} parent=1 // pred_check_branch
      %2549 = sbr.rel (0) target = $region121
    $region120: #{tpu_custom_call.1} parent=1 // pred_region
      %2551 = vsyncadd [#allocation4], 0
      %s2553 = sshll.u32 [#allocation19], 4
      %s2554 = int_to_ptr.vmem [resolvable:$true] %s2553
      %s2555 = sshll.u32 %s19, 4
      %s2556 = int_to_ptr.hbm [resolvable:$true] %s2555
      %2558 = dma.vmem_to_hbm [thread:$0]  %s2554, 32, %s2556, [#allocation4]
    $region121: #{tpu_custom_call.1} parent=1 // pred_fallthru
      _
    // Predicated region
    $region122: #{tpu_custom_call.1} parent=1 // pred_check
      _
    $region123: #{tpu_custom_call.1} parent=1 // pred_check_branch
      %2560 = sbr.rel (0) target = $region125
    $region124: #{tpu_custom_call.1} parent=1 // pred_region
      %2562 = dma.done [#allocation4], 32
    $region125: #{tpu_custom_call.1} parent=1 // pred_fallthru
      _
    %2563 = vsyncpa [#allocation3], 1
    %2564 = vsyncpa [#allocation6], 1
    %2565 = vsyncpa [#allocation9], 1
    %2566 = vsyncpa [#allocation12], 1
    %2567 = vsyncpa [#allocation15], 1
    %2568 = vsyncpa [#allocation18], 1
    %2569 = vsyncpa [#allocation4], 1

</llo_original>
